<compile_context>
chip_gen: v7x
topology: tpu7x:2x2x1
jax: 0.10.0
libtpu: 0.0.40
codegen_flags: <defaults>
</compile_context>

<pallas_src>
import jax
import jax.numpy as jnp
from jax.experimental import pallas as pl
from jax.experimental.pallas import tpu as pltpu


def _round_up(x, m):
    return ((x + m - 1) // m) * m


def _lstm_kernel(emb_ref, wih_ref, whh_ref, b_ref, wout_ref, bout_ref,
                 logit_ref, xp_ref):
    """Single-invocation LSTM + tanh/max-pool/tanh + Linear."""
    TB, _ = emb_ref.shape
    Hp4 = whh_ref.shape[1]
    Hp = Hp4 // 4
    B = logit_ref.shape[0]
    T = TB // B

    # Hoisted, non-recurrent input projection: one (T*B, D) @ (D, 4Hp) matmul
    # plus the fused bias, instead of T tiny per-step matmuls.
    xp_ref[...] = (
        jnp.dot(emb_ref[...], wih_ref[...], preferred_element_type=jnp.float32)
        + b_ref[...])

    whh = whh_ref[...]                                    # (Hp, 4Hp), resident

    def step(t, carry):
        h, c, m = carry
        base = pl.multiple_of(t * B, B)                   # sublane-aligned
        gates = xp_ref[pl.ds(base, B), :] + jnp.dot(
            h.astype(whh.dtype), whh, preferred_element_type=jnp.float32)
        # Hp is a multiple of 128 -> every gate slice is a full lane block.
        i_g = jax.nn.sigmoid(gates[:, 0 * Hp:1 * Hp])
        f_g = jax.nn.sigmoid(gates[:, 1 * Hp:2 * Hp])
        g_g = jnp.tanh(gates[:, 2 * Hp:3 * Hp])
        o_g = jax.nn.sigmoid(gates[:, 3 * Hp:4 * Hp])
        c_new = f_g * c + i_g * g_g
        h_new = o_g * jnp.tanh(c_new)
        # first tanh + running max over time (== F.max_pool1d over seq axis)
        m_new = jnp.maximum(m, jnp.tanh(h_new))
        return h_new, c_new, m_new

    h0 = jnp.zeros((B, Hp), jnp.float32)
    c0 = jnp.zeros((B, Hp), jnp.float32)
    m0 = jnp.full((B, Hp), -1.0, jnp.float32)             # tanh lower bound
    _, _, m_fin = jax.lax.fori_loop(0, T, step, (h0, c0, m0), unroll=True)

    pooled = jnp.tanh(m_fin)                              # second tanh
    logit_ref[...] = (
        jnp.dot(pooled.astype(wout_ref.dtype), wout_ref[...],
                preferred_element_type=jnp.float32)
        + bout_ref[...]).astype(logit_ref.dtype)


def _prepare_params(params):
    """Pad H/C up to lane-aligned (128) sizes, pre-transpose, cast to bf16."""
    wih = params["weight_ih"]                          # (4H, D)
    whh = params["weight_hh"]                          # (4H, H)
    bias = params["bias_ih"] + params["bias_hh"]       # (4H,)
    wout = params["out_weight"]                        # (C, H)
    bout = params["out_bias"]                          # (C,)

    H = whh.shape[1]
    D = wih.shape[1]
    C = wout.shape[0]
    Hp = max(_round_up(H, 128), 128)
    Cp = max(_round_up(C, 128), 128)

    wih_p = jnp.zeros((4 * Hp, D), wih.dtype)
    whh_p = jnp.zeros((4 * Hp, Hp), whh.dtype)
    b_p = jnp.zeros((4 * Hp,), bias.dtype)
    for g in range(4):                                  # i, f, g, o gate blocks
        wih_p = wih_p.at[g * Hp:g * Hp + H].set(wih[g * H:(g + 1) * H])
        whh_p = whh_p.at[g * Hp:g * Hp + H, :H].set(whh[g * H:(g + 1) * H])
        b_p = b_p.at[g * Hp:g * Hp + H].set(bias[g * H:(g + 1) * H])

    wout_p = jnp.zeros((Hp, Cp), wout.dtype).at[:H, :C].set(wout.T)
    bout_p = jnp.zeros((Cp,), bout.dtype).at[:C].set(bout)

    return dict(
        wih=wih_p.T.astype(jnp.bfloat16),               # (D, 4Hp)
        whh=whh_p.T.astype(jnp.bfloat16),               # (Hp, 4Hp)
        bias=b_p[None, :].astype(jnp.float32),          # (1, 4Hp)
        wout=wout_p.astype(jnp.bfloat16),               # (Hp, Cp)
        bout=bout_p[None, :].astype(jnp.float32),       # (1, Cp)
        Hp=Hp, Cp=Cp, C=C,
    )


def lstm_forward(token_ids, params):
    """token_ids: (T, B) int32 (seq-major, nn.LSTM default). Returns (B, C)."""
    prep = _prepare_params(params)
    Hp, Cp, C = prep["Hp"], prep["Cp"], prep["C"]

    emb = params["embed_weight"][token_ids]             # (T, B, D) glue gather
    T, B, D = emb.shape
    emb2d = emb.reshape(T * B, D).astype(jnp.bfloat16)  # (T*B, D)

    flops = (2 * T * B * D * 4 * Hp          # hoisted input projection
             + 2 * T * B * Hp * 4 * Hp       # recurrent matmuls
             + 2 * B * Hp * Cp)              # output Linear
    transcendentals = 6 * T * B * Hp + B * Hp
    operands = (emb2d, prep["wih"], prep["whh"], prep["bias"],
                prep["wout"], prep["bout"])
    bytes_accessed = sum(int(a.size) * a.dtype.itemsize for a in operands) \
        + B * Cp * 4

    logits_p = pl.pallas_call(
        _lstm_kernel,
        out_shape=jax.ShapeDtypeStruct((B, Cp), jnp.float32),
        in_specs=[pl.BlockSpec(memory_space=pltpu.MemorySpace.VMEM)] * 6,
        out_specs=pl.BlockSpec(memory_space=pltpu.MemorySpace.VMEM),
        scratch_shapes=[pltpu.VMEM((T * B, 4 * Hp), jnp.float32)],
        cost_estimate=pl.CostEstimate(flops=flops,
                                      transcendentals=transcendentals,
                                      bytes_accessed=bytes_accessed),
        compiler_params=pltpu.CompilerParams(
            vmem_limit_bytes=32 * 1024 * 1024),
    )(*operands)

    return logits_p[:, :C]                               # drop lane padding


def make_params(key, V, D, H, C):
    ks = jax.random.split(key, 7)
    scale = 0.1
    return {
        "embed_weight": scale * jax.random.normal(ks[0], (V, D), jnp.float32),
        "weight_ih":    scale * jax.random.normal(ks[1], (4 * H, D), jnp.float32),
        "weight_hh":    scale * jax.random.normal(ks[2], (4 * H, H), jnp.float32),
        "bias_ih":      scale * jax.random.normal(ks[3], (4 * H,), jnp.float32),
        "bias_hh":      scale * jax.random.normal(ks[4], (4 * H,), jnp.float32),
        "out_weight":   scale * jax.random.normal(ks[5], (C, H), jnp.float32),
        "out_bias":     scale * jax.random.normal(ks[6], (C,), jnp.float32),
    }


if __name__ == "__main__":
    # small config: embed_num V=50, embed_dim D=32, hidden H=32, classes C=8,
    # seq T=8, batch B=8
    V, D, H, C, T, B = 50, 32, 32, 8, 8, 8

    key = jax.random.PRNGKey(0)
    pkey, xkey = jax.random.split(key)
    params = make_params(pkey, V, D, H, C)
    token_ids = jax.random.randint(xkey, (T, B), 0, V, dtype=jnp.int32)

    logits = lstm_forward(token_ids, params)
    jax.block_until_ready(logits)
    assert logits.shape == (B, C)
    assert bool(jnp.all(jnp.isfinite(logits)))
    print("KERNEL_OK")
</pallas_src>

<mosaic_0001>
module attributes {stable_mosaic.version = 11 : i64} {
  func.func @_lstm_kernel(%arg0: memref<64x32xbf16, #tpu.memory_space<vmem>>, %arg1: memref<32x512xbf16, #tpu.memory_space<vmem>>, %arg2: memref<128x512xbf16, #tpu.memory_space<vmem>>, %arg3: memref<1x512xf32, #tpu.memory_space<vmem>>, %arg4: memref<128x128xbf16, #tpu.memory_space<vmem>>, %arg5: memref<1x128xf32, #tpu.memory_space<vmem>>, %arg6: memref<8x128xf32, #tpu.memory_space<vmem>>, %arg7: memref<64x512xf32, #tpu.memory_space<vmem>>) attributes {dimension_semantics = [], scalar_prefetch = 0 : i64, scratch_operands = 1 : i64, tpu.core_type = #tpu.core_type<tc>} {
    %c0 = arith.constant 0 : index
    %c0_0 = arith.constant 0 : index
    %0 = vector.load %arg0[%c0, %c0_0] : memref<64x32xbf16, #tpu.memory_space<vmem>>, vector<64x32xbf16>
    %c0_1 = arith.constant 0 : index
    %c0_2 = arith.constant 0 : index
    %1 = vector.load %arg1[%c0_1, %c0_2] : memref<32x512xbf16, #tpu.memory_space<vmem>>, vector<32x512xbf16>
    %cst = arith.constant dense<0.000000e+00> : vector<64x512xf32>
    %2 = tpu.matmul %0, %1, %cst {dimension_numbers = #tpu.dot_dimension_numbers<[1], [0], [0], [1], [0, 0, 1, 1], [], []>} : vector<64x32xbf16>, vector<32x512xbf16>, vector<64x512xf32> -> vector<64x512xf32>
    %c0_3 = arith.constant 0 : index
    %c0_4 = arith.constant 0 : index
    %3 = vector.load %arg3[%c0_3, %c0_4] : memref<1x512xf32, #tpu.memory_space<vmem>>, vector<1x512xf32>
    %4 = vector.broadcast %3 : vector<1x512xf32> to vector<64x512xf32>
    %5 = arith.addf %2, %4 : vector<64x512xf32>
    %c0_5 = arith.constant 0 : index
    %c0_6 = arith.constant 0 : index
    %6 = vector.load %arg7[%c0_5, %c0_6] : memref<64x512xf32, #tpu.memory_space<vmem>>, vector<64x512xf32>
    tpu.vector_store %arg7[%c0_5, %c0_6], %5 {strides = array<i32>} : memref<64x512xf32, #tpu.memory_space<vmem>>, vector<64x512xf32>,
    %c0_7 = arith.constant 0 : index
    %c0_8 = arith.constant 0 : index
    %7 = vector.load %arg2[%c0_7, %c0_8] : memref<128x512xbf16, #tpu.memory_space<vmem>>, vector<128x512xbf16>
    %cst_9 = arith.constant 0.000000e+00 : f32
    %8 = vector.broadcast %cst_9 : f32 to vector<8x128xf32>
    %cst_10 = arith.constant 0.000000e+00 : f32
    %9 = vector.broadcast %cst_10 : f32 to vector<8x128xf32>
    %cst_11 = arith.constant -1.000000e+00 : f32
    %10 = vector.broadcast %cst_11 : f32 to vector<8x128xf32>
    %c0_i32 = arith.constant 0 : i32
    %c8_i32 = arith.constant 8 : i32
    %11 = arith.muli %c0_i32, %c8_i32 : i32
    %12 = tpu.assume_multiple %11, 8 : i32
    %13 = arith.index_cast %12 : i32 to index
    %c0_12 = arith.constant 0 : index
    %14 = vector.load %arg7[%13, %c0_12] : memref<64x512xf32, #tpu.memory_space<vmem>>, vector<8x512xf32>
    %15 = arith.truncf %8 : vector<8x128xf32> to vector<8x128xbf16>
    %cst_13 = arith.constant dense<0.000000e+00> : vector<8x512xf32>
    %16 = tpu.matmul %15, %7, %cst_13 {dimension_numbers = #tpu.dot_dimension_numbers<[1], [0], [0], [1], [0, 0, 1, 1], [], []>} : vector<8x128xbf16>, vector<128x512xbf16>, vector<8x512xf32> -> vector<8x512xf32>
    %17 = arith.addf %14, %16 : vector<8x512xf32>
    %18 = vector.extract_strided_slice %17 {offsets = [0, 0], sizes = [8, 128], strides = [1, 1]} : vector<8x512xf32> to vector<8x128xf32>
    %19 = arith.negf %18 : vector<8x128xf32>
    %20 = math.exp %19 : vector<8x128xf32>
    %cst_14 = arith.constant 1.000000e+00 : f32
    %21 = vector.broadcast %cst_14 : f32 to vector<8x128xf32>
    %22 = arith.addf %21, %20 : vector<8x128xf32>
    %23 = arith.divf %21, %22 : vector<8x128xf32>
    %24 = vector.extract_strided_slice %17 {offsets = [0, 128], sizes = [8, 128], strides = [1, 1]} : vector<8x512xf32> to vector<8x128xf32>
    %25 = arith.negf %24 : vector<8x128xf32>
    %26 = math.exp %25 : vector<8x128xf32>
    %cst_15 = arith.constant 1.000000e+00 : f32
    %27 = vector.broadcast %cst_15 : f32 to vector<8x128xf32>
    %28 = arith.addf %27, %26 : vector<8x128xf32>
    %29 = arith.divf %27, %28 : vector<8x128xf32>
    %30 = vector.extract_strided_slice %17 {offsets = [0, 256], sizes = [8, 128], strides = [1, 1]} : vector<8x512xf32> to vector<8x128xf32>
    %31 = math.tanh %30 : vector<8x128xf32>
    %32 = vector.extract_strided_slice %17 {offsets = [0, 384], sizes = [8, 128], strides = [1, 1]} : vector<8x512xf32> to vector<8x128xf32>
    %33 = arith.negf %32 : vector<8x128xf32>
    %34 = math.exp %33 : vector<8x128xf32>
    %cst_16 = arith.constant 1.000000e+00 : f32
    %35 = vector.broadcast %cst_16 : f32 to vector<8x128xf32>
    %36 = arith.addf %35, %34 : vector<8x128xf32>
    %37 = arith.divf %35, %36 : vector<8x128xf32>
    %38 = arith.mulf %29, %9 : vector<8x128xf32>
    %39 = arith.mulf %23, %31 : vector<8x128xf32>
    %40 = arith.addf %38, %39 : vector<8x128xf32>
    %41 = math.tanh %40 : vector<8x128xf32>
    %42 = arith.mulf %37, %41 : vector<8x128xf32>
    %43 = math.tanh %42 : vector<8x128xf32>
    %44 = arith.maximumf %10, %43 : vector<8x128xf32>
    %c1_i32 = arith.constant 1 : i32
    %c8_i32_17 = arith.constant 8 : i32
    %45 = arith.muli %c1_i32, %c8_i32_17 : i32
    %46 = tpu.assume_multiple %45, 8 : i32
    %47 = arith.index_cast %46 : i32 to index
    %c0_18 = arith.constant 0 : index
    %48 = vector.load %arg7[%47, %c0_18] : memref<64x512xf32, #tpu.memory_space<vmem>>, vector<8x512xf32>
    %49 = arith.truncf %42 : vector<8x128xf32> to vector<8x128xbf16>
    %cst_19 = arith.constant dense<0.000000e+00> : vector<8x512xf32>
    %50 = tpu.matmul %49, %7, %cst_19 {dimension_numbers = #tpu.dot_dimension_numbers<[1], [0], [0], [1], [0, 0, 1, 1], [], []>} : vector<8x128xbf16>, vector<128x512xbf16>, vector<8x512xf32> -> vector<8x512xf32>
    %51 = arith.addf %48, %50 : vector<8x512xf32>
    %52 = vector.extract_strided_slice %51 {offsets = [0, 0], sizes = [8, 128], strides = [1, 1]} : vector<8x512xf32> to vector<8x128xf32>
    %53 = arith.negf %52 : vector<8x128xf32>
    %54 = math.exp %53 : vector<8x128xf32>
    %cst_20 = arith.constant 1.000000e+00 : f32
    %55 = vector.broadcast %cst_20 : f32 to vector<8x128xf32>
    %56 = arith.addf %55, %54 : vector<8x128xf32>
    %57 = arith.divf %55, %56 : vector<8x128xf32>
    %58 = vector.extract_strided_slice %51 {offsets = [0, 128], sizes = [8, 128], strides = [1, 1]} : vector<8x512xf32> to vector<8x128xf32>
    %59 = arith.negf %58 : vector<8x128xf32>
    %60 = math.exp %59 : vector<8x128xf32>
    %cst_21 = arith.constant 1.000000e+00 : f32
    %61 = vector.broadcast %cst_21 : f32 to vector<8x128xf32>
    %62 = arith.addf %61, %60 : vector<8x128xf32>
    %63 = arith.divf %61, %62 : vector<8x128xf32>
    %64 = vector.extract_strided_slice %51 {offsets = [0, 256], sizes = [8, 128], strides = [1, 1]} : vector<8x512xf32> to vector<8x128xf32>
    %65 = math.tanh %64 : vector<8x128xf32>
    %66 = vector.extract_strided_slice %51 {offsets = [0, 384], sizes = [8, 128], strides = [1, 1]} : vector<8x512xf32> to vector<8x128xf32>
    %67 = arith.negf %66 : vector<8x128xf32>
    %68 = math.exp %67 : vector<8x128xf32>
    %cst_22 = arith.constant 1.000000e+00 : f32
    %69 = vector.broadcast %cst_22 : f32 to vector<8x128xf32>
    %70 = arith.addf %69, %68 : vector<8x128xf32>
    %71 = arith.divf %69, %70 : vector<8x128xf32>
    %72 = arith.mulf %63, %40 : vector<8x128xf32>
    %73 = arith.mulf %57, %65 : vector<8x128xf32>
    %74 = arith.addf %72, %73 : vector<8x128xf32>
    %75 = math.tanh %74 : vector<8x128xf32>
    %76 = arith.mulf %71, %75 : vector<8x128xf32>
    %77 = math.tanh %76 : vector<8x128xf32>
    %78 = arith.maximumf %44, %77 : vector<8x128xf32>
    %c2_i32 = arith.constant 2 : i32
    %c8_i32_23 = arith.constant 8 : i32
    %79 = arith.muli %c2_i32, %c8_i32_23 : i32
    %80 = tpu.assume_multiple %79, 8 : i32
    %81 = arith.index_cast %80 : i32 to index
    %c0_24 = arith.constant 0 : index
    %82 = vector.load %arg7[%81, %c0_24] : memref<64x512xf32, #tpu.memory_space<vmem>>, vector<8x512xf32>
    %83 = arith.truncf %76 : vector<8x128xf32> to vector<8x128xbf16>
    %cst_25 = arith.constant dense<0.000000e+00> : vector<8x512xf32>
    %84 = tpu.matmul %83, %7, %cst_25 {dimension_numbers = #tpu.dot_dimension_numbers<[1], [0], [0], [1], [0, 0, 1, 1], [], []>} : vector<8x128xbf16>, vector<128x512xbf16>, vector<8x512xf32> -> vector<8x512xf32>
    %85 = arith.addf %82, %84 : vector<8x512xf32>
    %86 = vector.extract_strided_slice %85 {offsets = [0, 0], sizes = [8, 128], strides = [1, 1]} : vector<8x512xf32> to vector<8x128xf32>
    %87 = arith.negf %86 : vector<8x128xf32>
    %88 = math.exp %87 : vector<8x128xf32>
    %cst_26 = arith.constant 1.000000e+00 : f32
    %89 = vector.broadcast %cst_26 : f32 to vector<8x128xf32>
    %90 = arith.addf %89, %88 : vector<8x128xf32>
    %91 = arith.divf %89, %90 : vector<8x128xf32>
    %92 = vector.extract_strided_slice %85 {offsets = [0, 128], sizes = [8, 128], strides = [1, 1]} : vector<8x512xf32> to vector<8x128xf32>
    %93 = arith.negf %92 : vector<8x128xf32>
    %94 = math.exp %93 : vector<8x128xf32>
    %cst_27 = arith.constant 1.000000e+00 : f32
    %95 = vector.broadcast %cst_27 : f32 to vector<8x128xf32>
    %96 = arith.addf %95, %94 : vector<8x128xf32>
    %97 = arith.divf %95, %96 : vector<8x128xf32>
    %98 = vector.extract_strided_slice %85 {offsets = [0, 256], sizes = [8, 128], strides = [1, 1]} : vector<8x512xf32> to vector<8x128xf32>
    %99 = math.tanh %98 : vector<8x128xf32>
    %100 = vector.extract_strided_slice %85 {offsets = [0, 384], sizes = [8, 128], strides = [1, 1]} : vector<8x512xf32> to vector<8x128xf32>
    %101 = arith.negf %100 : vector<8x128xf32>
    %102 = math.exp %101 : vector<8x128xf32>
    %cst_28 = arith.constant 1.000000e+00 : f32
    %103 = vector.broadcast %cst_28 : f32 to vector<8x128xf32>
    %104 = arith.addf %103, %102 : vector<8x128xf32>
    %105 = arith.divf %103, %104 : vector<8x128xf32>
    %106 = arith.mulf %97, %74 : vector<8x128xf32>
    %107 = arith.mulf %91, %99 : vector<8x128xf32>
    %108 = arith.addf %106, %107 : vector<8x128xf32>
    %109 = math.tanh %108 : vector<8x128xf32>
    %110 = arith.mulf %105, %109 : vector<8x128xf32>
    %111 = math.tanh %110 : vector<8x128xf32>
    %112 = arith.maximumf %78, %111 : vector<8x128xf32>
    %c3_i32 = arith.constant 3 : i32
    %c8_i32_29 = arith.constant 8 : i32
    %113 = arith.muli %c3_i32, %c8_i32_29 : i32
    %114 = tpu.assume_multiple %113, 8 : i32
    %115 = arith.index_cast %114 : i32 to index
    %c0_30 = arith.constant 0 : index
    %116 = vector.load %arg7[%115, %c0_30] : memref<64x512xf32, #tpu.memory_space<vmem>>, vector<8x512xf32>
    %117 = arith.truncf %110 : vector<8x128xf32> to vector<8x128xbf16>
    %cst_31 = arith.constant dense<0.000000e+00> : vector<8x512xf32>
    %118 = tpu.matmul %117, %7, %cst_31 {dimension_numbers = #tpu.dot_dimension_numbers<[1], [0], [0], [1], [0, 0, 1, 1], [], []>} : vector<8x128xbf16>, vector<128x512xbf16>, vector<8x512xf32> -> vector<8x512xf32>
    %119 = arith.addf %116, %118 : vector<8x512xf32>
    %120 = vector.extract_strided_slice %119 {offsets = [0, 0], sizes = [8, 128], strides = [1, 1]} : vector<8x512xf32> to vector<8x128xf32>
    %121 = arith.negf %120 : vector<8x128xf32>
    %122 = math.exp %121 : vector<8x128xf32>
    %cst_32 = arith.constant 1.000000e+00 : f32
    %123 = vector.broadcast %cst_32 : f32 to vector<8x128xf32>
    %124 = arith.addf %123, %122 : vector<8x128xf32>
    %125 = arith.divf %123, %124 : vector<8x128xf32>
    %126 = vector.extract_strided_slice %119 {offsets = [0, 128], sizes = [8, 128], strides = [1, 1]} : vector<8x512xf32> to vector<8x128xf32>
    %127 = arith.negf %126 : vector<8x128xf32>
    %128 = math.exp %127 : vector<8x128xf32>
    %cst_33 = arith.constant 1.000000e+00 : f32
    %129 = vector.broadcast %cst_33 : f32 to vector<8x128xf32>
    %130 = arith.addf %129, %128 : vector<8x128xf32>
    %131 = arith.divf %129, %130 : vector<8x128xf32>
    %132 = vector.extract_strided_slice %119 {offsets = [0, 256], sizes = [8, 128], strides = [1, 1]} : vector<8x512xf32> to vector<8x128xf32>
    %133 = math.tanh %132 : vector<8x128xf32>
    %134 = vector.extract_strided_slice %119 {offsets = [0, 384], sizes = [8, 128], strides = [1, 1]} : vector<8x512xf32> to vector<8x128xf32>
    %135 = arith.negf %134 : vector<8x128xf32>
    %136 = math.exp %135 : vector<8x128xf32>
    %cst_34 = arith.constant 1.000000e+00 : f32
    %137 = vector.broadcast %cst_34 : f32 to vector<8x128xf32>
    %138 = arith.addf %137, %136 : vector<8x128xf32>
    %139 = arith.divf %137, %138 : vector<8x128xf32>
    %140 = arith.mulf %131, %108 : vector<8x128xf32>
    %141 = arith.mulf %125, %133 : vector<8x128xf32>
    %142 = arith.addf %140, %141 : vector<8x128xf32>
    %143 = math.tanh %142 : vector<8x128xf32>
    %144 = arith.mulf %139, %143 : vector<8x128xf32>
    %145 = math.tanh %144 : vector<8x128xf32>
    %146 = arith.maximumf %112, %145 : vector<8x128xf32>
    %c4_i32 = arith.constant 4 : i32
    %c8_i32_35 = arith.constant 8 : i32
    %147 = arith.muli %c4_i32, %c8_i32_35 : i32
    %148 = tpu.assume_multiple %147, 8 : i32
    %149 = arith.index_cast %148 : i32 to index
    %c0_36 = arith.constant 0 : index
    %150 = vector.load %arg7[%149, %c0_36] : memref<64x512xf32, #tpu.memory_space<vmem>>, vector<8x512xf32>
    %151 = arith.truncf %144 : vector<8x128xf32> to vector<8x128xbf16>
    %cst_37 = arith.constant dense<0.000000e+00> : vector<8x512xf32>
    %152 = tpu.matmul %151, %7, %cst_37 {dimension_numbers = #tpu.dot_dimension_numbers<[1], [0], [0], [1], [0, 0, 1, 1], [], []>} : vector<8x128xbf16>, vector<128x512xbf16>, vector<8x512xf32> -> vector<8x512xf32>
    %153 = arith.addf %150, %152 : vector<8x512xf32>
    %154 = vector.extract_strided_slice %153 {offsets = [0, 0], sizes = [8, 128], strides = [1, 1]} : vector<8x512xf32> to vector<8x128xf32>
    %155 = arith.negf %154 : vector<8x128xf32>
    %156 = math.exp %155 : vector<8x128xf32>
    %cst_38 = arith.constant 1.000000e+00 : f32
    %157 = vector.broadcast %cst_38 : f32 to vector<8x128xf32>
    %158 = arith.addf %157, %156 : vector<8x128xf32>
    %159 = arith.divf %157, %158 : vector<8x128xf32>
    %160 = vector.extract_strided_slice %153 {offsets = [0, 128], sizes = [8, 128], strides = [1, 1]} : vector<8x512xf32> to vector<8x128xf32>
    %161 = arith.negf %160 : vector<8x128xf32>
    %162 = math.exp %161 : vector<8x128xf32>
    %cst_39 = arith.constant 1.000000e+00 : f32
    %163 = vector.broadcast %cst_39 : f32 to vector<8x128xf32>
    %164 = arith.addf %163, %162 : vector<8x128xf32>
    %165 = arith.divf %163, %164 : vector<8x128xf32>
    %166 = vector.extract_strided_slice %153 {offsets = [0, 256], sizes = [8, 128], strides = [1, 1]} : vector<8x512xf32> to vector<8x128xf32>
    %167 = math.tanh %166 : vector<8x128xf32>
    %168 = vector.extract_strided_slice %153 {offsets = [0, 384], sizes = [8, 128], strides = [1, 1]} : vector<8x512xf32> to vector<8x128xf32>
    %169 = arith.negf %168 : vector<8x128xf32>
    %170 = math.exp %169 : vector<8x128xf32>
    %cst_40 = arith.constant 1.000000e+00 : f32
    %171 = vector.broadcast %cst_40 : f32 to vector<8x128xf32>
    %172 = arith.addf %171, %170 : vector<8x128xf32>
    %173 = arith.divf %171, %172 : vector<8x128xf32>
    %174 = arith.mulf %165, %142 : vector<8x128xf32>
    %175 = arith.mulf %159, %167 : vector<8x128xf32>
    %176 = arith.addf %174, %175 : vector<8x128xf32>
    %177 = math.tanh %176 : vector<8x128xf32>
    %178 = arith.mulf %173, %177 : vector<8x128xf32>
    %179 = math.tanh %178 : vector<8x128xf32>
    %180 = arith.maximumf %146, %179 : vector<8x128xf32>
    %c5_i32 = arith.constant 5 : i32
    %c8_i32_41 = arith.constant 8 : i32
    %181 = arith.muli %c5_i32, %c8_i32_41 : i32
    %182 = tpu.assume_multiple %181, 8 : i32
    %183 = arith.index_cast %182 : i32 to index
    %c0_42 = arith.constant 0 : index
    %184 = vector.load %arg7[%183, %c0_42] : memref<64x512xf32, #tpu.memory_space<vmem>>, vector<8x512xf32>
    %185 = arith.truncf %178 : vector<8x128xf32> to vector<8x128xbf16>
    %cst_43 = arith.constant dense<0.000000e+00> : vector<8x512xf32>
    %186 = tpu.matmul %185, %7, %cst_43 {dimension_numbers = #tpu.dot_dimension_numbers<[1], [0], [0], [1], [0, 0, 1, 1], [], []>} : vector<8x128xbf16>, vector<128x512xbf16>, vector<8x512xf32> -> vector<8x512xf32>
    %187 = arith.addf %184, %186 : vector<8x512xf32>
    %188 = vector.extract_strided_slice %187 {offsets = [0, 0], sizes = [8, 128], strides = [1, 1]} : vector<8x512xf32> to vector<8x128xf32>
    %189 = arith.negf %188 : vector<8x128xf32>
    %190 = math.exp %189 : vector<8x128xf32>
    %cst_44 = arith.constant 1.000000e+00 : f32
    %191 = vector.broadcast %cst_44 : f32 to vector<8x128xf32>
    %192 = arith.addf %191, %190 : vector<8x128xf32>
    %193 = arith.divf %191, %192 : vector<8x128xf32>
    %194 = vector.extract_strided_slice %187 {offsets = [0, 128], sizes = [8, 128], strides = [1, 1]} : vector<8x512xf32> to vector<8x128xf32>
    %195 = arith.negf %194 : vector<8x128xf32>
    %196 = math.exp %195 : vector<8x128xf32>
    %cst_45 = arith.constant 1.000000e+00 : f32
    %197 = vector.broadcast %cst_45 : f32 to vector<8x128xf32>
    %198 = arith.addf %197, %196 : vector<8x128xf32>
    %199 = arith.divf %197, %198 : vector<8x128xf32>
    %200 = vector.extract_strided_slice %187 {offsets = [0, 256], sizes = [8, 128], strides = [1, 1]} : vector<8x512xf32> to vector<8x128xf32>
    %201 = math.tanh %200 : vector<8x128xf32>
    %202 = vector.extract_strided_slice %187 {offsets = [0, 384], sizes = [8, 128], strides = [1, 1]} : vector<8x512xf32> to vector<8x128xf32>
    %203 = arith.negf %202 : vector<8x128xf32>
    %204 = math.exp %203 : vector<8x128xf32>
    %cst_46 = arith.constant 1.000000e+00 : f32
    %205 = vector.broadcast %cst_46 : f32 to vector<8x128xf32>
    %206 = arith.addf %205, %204 : vector<8x128xf32>
    %207 = arith.divf %205, %206 : vector<8x128xf32>
    %208 = arith.mulf %199, %176 : vector<8x128xf32>
    %209 = arith.mulf %193, %201 : vector<8x128xf32>
    %210 = arith.addf %208, %209 : vector<8x128xf32>
    %211 = math.tanh %210 : vector<8x128xf32>
    %212 = arith.mulf %207, %211 : vector<8x128xf32>
    %213 = math.tanh %212 : vector<8x128xf32>
    %214 = arith.maximumf %180, %213 : vector<8x128xf32>
    %c6_i32 = arith.constant 6 : i32
    %c8_i32_47 = arith.constant 8 : i32
    %215 = arith.muli %c6_i32, %c8_i32_47 : i32
    %216 = tpu.assume_multiple %215, 8 : i32
    %217 = arith.index_cast %216 : i32 to index
    %c0_48 = arith.constant 0 : index
    %218 = vector.load %arg7[%217, %c0_48] : memref<64x512xf32, #tpu.memory_space<vmem>>, vector<8x512xf32>
    %219 = arith.truncf %212 : vector<8x128xf32> to vector<8x128xbf16>
    %cst_49 = arith.constant dense<0.000000e+00> : vector<8x512xf32>
    %220 = tpu.matmul %219, %7, %cst_49 {dimension_numbers = #tpu.dot_dimension_numbers<[1], [0], [0], [1], [0, 0, 1, 1], [], []>} : vector<8x128xbf16>, vector<128x512xbf16>, vector<8x512xf32> -> vector<8x512xf32>
    %221 = arith.addf %218, %220 : vector<8x512xf32>
    %222 = vector.extract_strided_slice %221 {offsets = [0, 0], sizes = [8, 128], strides = [1, 1]} : vector<8x512xf32> to vector<8x128xf32>
    %223 = arith.negf %222 : vector<8x128xf32>
    %224 = math.exp %223 : vector<8x128xf32>
    %cst_50 = arith.constant 1.000000e+00 : f32
    %225 = vector.broadcast %cst_50 : f32 to vector<8x128xf32>
    %226 = arith.addf %225, %224 : vector<8x128xf32>
    %227 = arith.divf %225, %226 : vector<8x128xf32>
    %228 = vector.extract_strided_slice %221 {offsets = [0, 128], sizes = [8, 128], strides = [1, 1]} : vector<8x512xf32> to vector<8x128xf32>
    %229 = arith.negf %228 : vector<8x128xf32>
    %230 = math.exp %229 : vector<8x128xf32>
    %cst_51 = arith.constant 1.000000e+00 : f32
    %231 = vector.broadcast %cst_51 : f32 to vector<8x128xf32>
    %232 = arith.addf %231, %230 : vector<8x128xf32>
    %233 = arith.divf %231, %232 : vector<8x128xf32>
    %234 = vector.extract_strided_slice %221 {offsets = [0, 256], sizes = [8, 128], strides = [1, 1]} : vector<8x512xf32> to vector<8x128xf32>
    %235 = math.tanh %234 : vector<8x128xf32>
    %236 = vector.extract_strided_slice %221 {offsets = [0, 384], sizes = [8, 128], strides = [1, 1]} : vector<8x512xf32> to vector<8x128xf32>
    %237 = arith.negf %236 : vector<8x128xf32>
    %238 = math.exp %237 : vector<8x128xf32>
    %cst_52 = arith.constant 1.000000e+00 : f32
    %239 = vector.broadcast %cst_52 : f32 to vector<8x128xf32>
    %240 = arith.addf %239, %238 : vector<8x128xf32>
    %241 = arith.divf %239, %240 : vector<8x128xf32>
    %242 = arith.mulf %233, %210 : vector<8x128xf32>
    %243 = arith.mulf %227, %235 : vector<8x128xf32>
    %244 = arith.addf %242, %243 : vector<8x128xf32>
    %245 = math.tanh %244 : vector<8x128xf32>
    %246 = arith.mulf %241, %245 : vector<8x128xf32>
    %247 = math.tanh %246 : vector<8x128xf32>
    %248 = arith.maximumf %214, %247 : vector<8x128xf32>
    %c7_i32 = arith.constant 7 : i32
    %c8_i32_53 = arith.constant 8 : i32
    %249 = arith.muli %c7_i32, %c8_i32_53 : i32
    %250 = tpu.assume_multiple %249, 8 : i32
    %251 = arith.index_cast %250 : i32 to index
    %c0_54 = arith.constant 0 : index
    %252 = vector.load %arg7[%251, %c0_54] : memref<64x512xf32, #tpu.memory_space<vmem>>, vector<8x512xf32>
    %253 = arith.truncf %246 : vector<8x128xf32> to vector<8x128xbf16>
    %cst_55 = arith.constant dense<0.000000e+00> : vector<8x512xf32>
    %254 = tpu.matmul %253, %7, %cst_55 {dimension_numbers = #tpu.dot_dimension_numbers<[1], [0], [0], [1], [0, 0, 1, 1], [], []>} : vector<8x128xbf16>, vector<128x512xbf16>, vector<8x512xf32> -> vector<8x512xf32>
    %255 = arith.addf %252, %254 : vector<8x512xf32>
    %256 = vector.extract_strided_slice %255 {offsets = [0, 0], sizes = [8, 128], strides = [1, 1]} : vector<8x512xf32> to vector<8x128xf32>
    %257 = arith.negf %256 : vector<8x128xf32>
    %258 = math.exp %257 : vector<8x128xf32>
    %cst_56 = arith.constant 1.000000e+00 : f32
    %259 = vector.broadcast %cst_56 : f32 to vector<8x128xf32>
    %260 = arith.addf %259, %258 : vector<8x128xf32>
    %261 = arith.divf %259, %260 : vector<8x128xf32>
    %262 = vector.extract_strided_slice %255 {offsets = [0, 128], sizes = [8, 128], strides = [1, 1]} : vector<8x512xf32> to vector<8x128xf32>
    %263 = arith.negf %262 : vector<8x128xf32>
    %264 = math.exp %263 : vector<8x128xf32>
    %cst_57 = arith.constant 1.000000e+00 : f32
    %265 = vector.broadcast %cst_57 : f32 to vector<8x128xf32>
    %266 = arith.addf %265, %264 : vector<8x128xf32>
    %267 = arith.divf %265, %266 : vector<8x128xf32>
    %268 = vector.extract_strided_slice %255 {offsets = [0, 256], sizes = [8, 128], strides = [1, 1]} : vector<8x512xf32> to vector<8x128xf32>
    %269 = math.tanh %268 : vector<8x128xf32>
    %270 = vector.extract_strided_slice %255 {offsets = [0, 384], sizes = [8, 128], strides = [1, 1]} : vector<8x512xf32> to vector<8x128xf32>
    %271 = arith.negf %270 : vector<8x128xf32>
    %272 = math.exp %271 : vector<8x128xf32>
    %cst_58 = arith.constant 1.000000e+00 : f32
    %273 = vector.broadcast %cst_58 : f32 to vector<8x128xf32>
    %274 = arith.addf %273, %272 : vector<8x128xf32>
    %275 = arith.divf %273, %274 : vector<8x128xf32>
    %276 = arith.mulf %267, %244 : vector<8x128xf32>
    %277 = arith.mulf %261, %269 : vector<8x128xf32>
    %278 = arith.addf %276, %277 : vector<8x128xf32>
    %279 = math.tanh %278 : vector<8x128xf32>
    %280 = arith.mulf %275, %279 : vector<8x128xf32>
    %281 = math.tanh %280 : vector<8x128xf32>
    %282 = arith.maximumf %248, %281 : vector<8x128xf32>
    %c8_i32_59 = arith.constant 8 : i32
    %283 = math.tanh %282 : vector<8x128xf32>
    %284 = arith.truncf %283 : vector<8x128xf32> to vector<8x128xbf16>
    %c0_60 = arith.constant 0 : index
    %c0_61 = arith.constant 0 : index
    %285 = vector.load %arg4[%c0_60, %c0_61] : memref<128x128xbf16, #tpu.memory_space<vmem>>, vector<128x128xbf16>
    %cst_62 = arith.constant dense<0.000000e+00> : vector<8x128xf32>
    %286 = tpu.matmul %284, %285, %cst_62 {dimension_numbers = #tpu.dot_dimension_numbers<[1], [0], [0], [1], [0, 0, 1, 1], [], []>} : vector<8x128xbf16>, vector<128x128xbf16>, vector<8x128xf32> -> vector<8x128xf32>
    %c0_63 = arith.constant 0 : index
    %c0_64 = arith.constant 0 : index
    %287 = vector.load %arg5[%c0_63, %c0_64] : memref<1x128xf32, #tpu.memory_space<vmem>>, vector<1x128xf32>
    %288 = vector.broadcast %287 : vector<1x128xf32> to vector<8x128xf32>
    %289 = arith.addf %286, %288 : vector<8x128xf32>
    %c0_65 = arith.constant 0 : index
    %c0_66 = arith.constant 0 : index
    %290 = vector.load %arg6[%c0_65, %c0_66] : memref<8x128xf32, #tpu.memory_space<vmem>>, vector<8x128xf32>
    tpu.vector_store %arg6[%c0_65, %c0_66], %289 {strides = array<i32>} : memref<8x128xf32, #tpu.memory_space<vmem>>, vector<8x128xf32>,
    return
  }
}

</mosaic_0001>

<llo_original>
// kernel: tpu_custom_call.1
$region0: #{tpu_custom_call.1}
  #allocation0 [shape = 'u32[]', space=smem, size = 0x4, offset = 0x4, fixed_abs, tag = 'smem constant byte address 0x4 - core index']
  #allocation1 [shape = 'u32[144,128]{1,0:T(1,128)}', space=vmem, size = 0x12000, scoped, tag = 'internal scratch']
  #allocation2 [shape = 'f32[64,512]{1,0:T(8,128)}', space=vmem, size = 0x20000, scoped, tag = 'scratch operand']
  %s0 = inlined_call_operand.vmem [shape: bf16[64,32], index: 0, kind: input, shape index: {}]
  %s1 = inlined_call_operand.hbm [shape: bf16[32,512], index: 1, kind: input, shape index: {}]
  %s2 = inlined_call_operand.hbm [shape: bf16[128,512], index: 2, kind: input, shape index: {}]
  %s3 = inlined_call_operand.vmem [shape: f32[1,512], index: 3, kind: input, shape index: {}]
  %s4 = inlined_call_operand.hbm [shape: bf16[128,128], index: 4, kind: input, shape index: {}]
  %s5 = inlined_call_operand.vmem [shape: f32[1,128], index: 5, kind: input, shape index: {}]
  %s6 = inlined_call_operand.hbm [shape: f32[8,128], index: 6, kind: output, shape index: {}]
  %s7 = sld [smem:[#allocation0]]
  $region46: #{tpu_custom_call.1} parent=0
    _
  %s9 = ssub.s32 1, %s7
  %s10 = scalar_select 0, %s9, %s7
  $region1: #{tpu_custom_call.1} parent=0
    #allocation3 [shape = 'u8[32768]{0}', space=vmem, size = 0x8000, scoped, tag = 'input window, operand 1, single buffered']
    #allocation4 [shape = 's32[1]{0}', space=sflag, size = 0x4, scoped, tag = 'scoped memory for tpu_custom_call.1']
    #allocation5 [shape = 's32[1]{0}', space=sflag, size = 0x4, scoped, tag = 'scoped memory for tpu_custom_call.1']
    #allocation6 [shape = 'u8[131072]{0}', space=vmem, size = 0x20000, scoped, tag = 'input window, operand 2, single buffered']
    #allocation7 [shape = 's32[1]{0}', space=sflag, size = 0x4, scoped, tag = 'scoped memory for tpu_custom_call.1']
    #allocation8 [shape = 'u8[32768]{0}', space=vmem, size = 0x8000, scoped, tag = 'input window, operand 4, single buffered']
    #allocation9 [shape = 'u8[4096]{0}', space=vmem, size = 0x1000, scoped, tag = 'output window, operand 0, single buffered']
    %11 = vsyncpa [#allocation4], 0
    %12 = vsyncpa [#allocation7], 0
    %13 = vsyncpa [#allocation5], 0
    // Predicated region
    $region2: #{tpu_custom_call.1} parent=1 // pred_check
      _
    $region3: #{tpu_custom_call.1} parent=1 // pred_check_branch
      %15 = sbr.rel (0) target = $region5
    $region4: #{tpu_custom_call.1} parent=1 // pred_region
      _
    $region5: #{tpu_custom_call.1} parent=1 // pred_fallthru
      _
    // Predicated region
    $region6: #{tpu_custom_call.1} parent=1 // pred_check
      _
    $region7: #{tpu_custom_call.1} parent=1 // pred_check_branch
      %17 = sbr.rel (0) target = $region9
    $region8: #{tpu_custom_call.1} parent=1 // pred_region
      %s19 = ssub.s32 1024, 1024
      %20 = vsyncadd [#allocation4], %s19
      %s21 = sshll.u32 [#allocation3], 4
      %s22 = int_to_ptr.vmem [resolvable:$true] %s21
      %27 = dma.hbm_to_vmem [thread:$0]  %s1, 1024, %s22, [#allocation4], 256, 256, 16
    $region9: #{tpu_custom_call.1} parent=1 // pred_fallthru
      _
    // Predicated region
    $region10: #{tpu_custom_call.1} parent=1 // pred_check
      _
    $region11: #{tpu_custom_call.1} parent=1 // pred_check_branch
      %29 = sbr.rel (0) target = $region13
    $region12: #{tpu_custom_call.1} parent=1 // pred_region
      %s31 = ssub.s32 4096, 4096
      %32 = vsyncadd [#allocation7], %s31
      %s33 = sshll.u32 [#allocation6], 4
      %s34 = int_to_ptr.vmem [resolvable:$true] %s33
      %39 = dma.hbm_to_vmem [thread:$0]  %s2, 4096, %s34, [#allocation7], 256, 256, 16
    $region13: #{tpu_custom_call.1} parent=1 // pred_fallthru
      _
    // Predicated region
    $region14: #{tpu_custom_call.1} parent=1 // pred_check
      _
    $region15: #{tpu_custom_call.1} parent=1 // pred_check_branch
      %41 = sbr.rel (0) target = $region17
    $region16: #{tpu_custom_call.1} parent=1 // pred_region
      _
    $region17: #{tpu_custom_call.1} parent=1 // pred_fallthru
      _
    // Predicated region
    $region18: #{tpu_custom_call.1} parent=1 // pred_check
      _
    $region19: #{tpu_custom_call.1} parent=1 // pred_check_branch
      %43 = sbr.rel (0) target = $region21
    $region20: #{tpu_custom_call.1} parent=1 // pred_region
      %s45 = ssub.s32 1024, 1024
      %46 = vsyncadd [#allocation7], %s45
      %s47 = sshll.u32 [#allocation8], 4
      %s48 = int_to_ptr.vmem [resolvable:$true] %s47
      %53 = dma.hbm_to_vmem [thread:$0]  %s4, 1024, %s48, [#allocation7], 64, 64, 4
    $region21: #{tpu_custom_call.1} parent=1 // pred_fallthru
      _
    // Predicated region
    $region22: #{tpu_custom_call.1} parent=1 // pred_check
      _
    $region23: #{tpu_custom_call.1} parent=1 // pred_check_branch
      %55 = sbr.rel (0) target = $region25
    $region24: #{tpu_custom_call.1} parent=1 // pred_region
      _
    $region25: #{tpu_custom_call.1} parent=1 // pred_fallthru
      _
    // Predicated region
    $region26: #{tpu_custom_call.1} parent=1 // pred_check
      _
    $region27: #{tpu_custom_call.1} parent=1 // pred_check_branch
      %57 = sbr.rel (0) target = $region29
    $region28: #{tpu_custom_call.1} parent=1 // pred_region
      %58 = dma.done [#allocation4], 1024
    $region29: #{tpu_custom_call.1} parent=1 // pred_fallthru
      _
    // Predicated region
    $region30: #{tpu_custom_call.1} parent=1 // pred_check
      _
    $region31: #{tpu_custom_call.1} parent=1 // pred_check_branch
      %60 = sbr.rel (0) target = $region33
    $region32: #{tpu_custom_call.1} parent=1 // pred_region
      %61 = dma.done [#allocation7], 4096
    $region33: #{tpu_custom_call.1} parent=1 // pred_fallthru
      _
    // Predicated region
    $region34: #{tpu_custom_call.1} parent=1 // pred_check
      _
    $region35: #{tpu_custom_call.1} parent=1 // pred_check_branch
      %63 = sbr.rel (0) target = $region37
    $region36: #{tpu_custom_call.1} parent=1 // pred_region
      %64 = dma.done [#allocation7], 1024
    $region37: #{tpu_custom_call.1} parent=1 // pred_fallthru
      _
    %v66 = vld [vmem:[%s0] sm:$0xf]
    %v67 = vld [vmem:[%s0 + $0x4] sm:$0xf]
    %v68 = vld [vmem:[%s0 + $0x8] sm:$0xf]
    %v69 = vld [vmem:[%s0 + $0xc] sm:$0xf]
    %v70 = vld [vmem:[%s0 + $0x10] sm:$0xf]
    %v71 = vld [vmem:[%s0 + $0x14] sm:$0xf]
    %v72 = vld [vmem:[%s0 + $0x18] sm:$0xf]
    %v73 = vld [vmem:[%s0 + $0x1c] sm:$0xf]
    %v74 = vld [vmem:[#allocation3] sm:$0xff]
    %v75 = vld [vmem:[#allocation3 + $0x8] sm:$0xff]
    %v76 = vld [vmem:[#allocation3 + $0x10] sm:$0xff]
    %v77 = vld [vmem:[#allocation3 + $0x18] sm:$0xff]
    %v78 = vld [vmem:[#allocation3 + $0x20] sm:$0xff]
    %v79 = vld [vmem:[#allocation3 + $0x28] sm:$0xff]
    %v80 = vld [vmem:[#allocation3 + $0x30] sm:$0xff]
    %v81 = vld [vmem:[#allocation3 + $0x38] sm:$0xff]
    %v82 = vld [vmem:[%s3] sm:$0xf]
    %v84 = vlaneseq
    %v85 = vshrl.u32 %v84, 7
    %v86 = vsub.s32 0, %v85
    %v87 = vrot.slane %v82, %v86
    %v88 = vlaneseq
    %v89 = vshrl.u32 %v88, 7
    %v90 = vsub.s32 1, %v89
    %v91 = vrot.slane %v82, %v90
    %v92 = vlaneseq
    %v93 = vshrl.u32 %v92, 7
    %v94 = vsub.s32 2, %v93
    %v95 = vrot.slane %v82, %v94
    %v96 = vlaneseq
    %v97 = vshrl.u32 %v96, 7
    %v98 = vsub.s32 3, %v97
    %v99 = vrot.slane %v82, %v98
    %v112 = vunpack.c.l.b16 %v66
    %v113 = vunpack.c.l.b16 %v67
    %v114 = vunpack.c.l.b16 %v68
    %v115 = vunpack.c.l.b16 %v69
    %v116 = vunpack.c.l.b16 %v70
    %v117 = vunpack.c.l.b16 %v71
    %v118 = vunpack.c.l.b16 %v72
    %v119 = vunpack.c.l.b16 %v73
    %v120 = vpack.c.b16 %v113, %v112
    %v121 = vpack.c.b16 %v115, %v114
    %v122 = vpack.c.b16 %v117, %v116
    %v123 = vpack.c.b16 %v119, %v118
    %v132 = vunpack.c.l.b16 %v74
    %v133 = vunpack.c.h.b16 %v74
    %v134 = vunpack.c.l.b16 %v75
    %v135 = vunpack.c.h.b16 %v75
    %v136 = vunpack.c.l.b16 %v76
    %v137 = vunpack.c.h.b16 %v76
    %v138 = vunpack.c.l.b16 %v77
    %v139 = vunpack.c.h.b16 %v77
    %v140 = vunpack.c.l.b16 %v78
    %v141 = vunpack.c.h.b16 %v78
    %v142 = vunpack.c.l.b16 %v79
    %v143 = vunpack.c.h.b16 %v79
    %v144 = vunpack.c.l.b16 %v80
    %v145 = vunpack.c.h.b16 %v80
    %v146 = vunpack.c.l.b16 %v81
    %v147 = vunpack.c.h.b16 %v81
    %v148 = vpack.c.b16 %v136, %v132
    %v149 = vpack.c.b16 %v137, %v133
    %v150 = vpack.c.b16 %v138, %v134
    %v151 = vpack.c.b16 %v139, %v135
    %v152 = vpack.c.b16 %v144, %v140
    %v153 = vpack.c.b16 %v145, %v141
    %v154 = vpack.c.b16 %v146, %v142
    %v155 = vpack.c.b16 %v147, %v143
    %vm164 = vcmask 261120
    %v166 = vsel %vm164, %v120, 0
    %v169 = vsel %vm164, %v121, 0
    %v172 = vsel %vm164, %v122, 0
    %v175 = vsel %vm164, %v123, 0
    %177 = vmatprep.subr.bf16.mxu0 %v149
    %178 = vmatpush1.bf16.msra.mxu0 %v148
    %179 = vmatprep.subr.bf16.mxu0 %v153
    %180 = vmatpush1.bf16.msra.mxu0 %v152
    %181 = vmatprep.subr.bf16.mxu0 0
    %182 = vmatpush1.bf16.msra.mxu0 0
    %183 = vmatprep.subr.bf16.mxu0 0
    %184 = vmatpush1.bf16.msra.mxu0 0
    %185 = vmatprep.subr.bf16.mxu0 0
    %186 = vmatpush1.bf16.msra.mxu0 0
    %187 = vmatprep.subr.bf16.mxu0 0
    %188 = vmatpush1.bf16.msra.mxu0 0
    %189 = vmatprep.subr.bf16.mxu0 0
    %190 = vmatpush1.bf16.msra.mxu0 0
    %191 = vmatprep.subr.bf16.mxu0 0
    %192 = vmatpush1.bf16.msra.mxu0 0
    %193 = vmatprep.subr.bf16.mxu0 0
    %194 = vmatpush1.bf16.msra.mxu0 0
    %195 = vmatprep.subr.bf16.mxu0 0
    %196 = vmatpush1.bf16.msra.mxu0 0
    %197 = vmatprep.subr.bf16.mxu0 0
    %198 = vmatpush1.bf16.msra.mxu0 0
    %199 = vmatprep.subr.bf16.mxu0 0
    %200 = vmatpush1.bf16.msra.mxu0 0
    %201 = vmatprep.subr.bf16.mxu0 0
    %202 = vmatpush1.bf16.msra.mxu0 0
    %203 = vmatprep.subr.bf16.mxu0 0
    %204 = vmatpush1.bf16.msra.mxu0 0
    %205 = vmatprep.subr.bf16.mxu0 0
    %206 = vmatpush1.bf16.msra.mxu0 0
    %207 = vmatprep.subr.bf16.mxu0 0
    %208 = vmatpush1.bf16.msra.mxu0 0
    %209 = vmatprep.mubr.bf16.mxu0 0
    %210 = vmatmul.mubr.bf16.gmra.mrb[0].mxu0 %v166
    %v211 = vpop.f32.mrb[0].mxu0
    %v212 = vadd.f32 %v87, %v211
    %v213 = vpop.f32.mrb[0].mxu0
    %v214 = vadd.f32 %v91, %v213
    %v215 = vpop.f32.mrb[0].mxu0
    %v216 = vadd.f32 %v87, %v215
    %v217 = vpop.f32.mrb[0].mxu0
    %v218 = vadd.f32 %v91, %v217
    %219 = vmatprep.mubr.bf16.mxu0 0
    %220 = vmatmul.mubr.bf16.gmra.mrb[0].mxu0 %v169
    %v221 = vpop.f32.mrb[0].mxu0
    %v222 = vadd.f32 %v87, %v221
    %v223 = vpop.f32.mrb[0].mxu0
    %v224 = vadd.f32 %v91, %v223
    %v225 = vpop.f32.mrb[0].mxu0
    %v226 = vadd.f32 %v87, %v225
    %v227 = vpop.f32.mrb[0].mxu0
    %v228 = vadd.f32 %v91, %v227
    %229 = vmatprep.mubr.bf16.mxu0 0
    %230 = vmatmul.mubr.bf16.gmra.mrb[0].mxu0 %v172
    %v231 = vpop.f32.mrb[0].mxu0
    %v232 = vadd.f32 %v87, %v231
    %v233 = vpop.f32.mrb[0].mxu0
    %v234 = vadd.f32 %v91, %v233
    %v235 = vpop.f32.mrb[0].mxu0
    %v236 = vadd.f32 %v87, %v235
    %v237 = vpop.f32.mrb[0].mxu0
    %v238 = vadd.f32 %v91, %v237
    %239 = vmatprep.mubr.bf16.mxu0 0
    %240 = vmatmul.mubr.bf16.gmra.mrb[0].mxu0 %v175
    %v241 = vpop.f32.mrb[0].mxu0
    %v242 = vadd.f32 %v87, %v241
    %v243 = vpop.f32.mrb[0].mxu0
    %v244 = vadd.f32 %v91, %v243
    %v245 = vpop.f32.mrb[0].mxu0
    %v246 = vadd.f32 %v87, %v245
    %v247 = vpop.f32.mrb[0].mxu0
    %v248 = vadd.f32 %v91, %v247
    %249 = vdwg.mxu0
    %250 = vmatprep.subr.bf16.mxu0 %v151
    %251 = vmatpush1.bf16.msra.mxu0 %v150
    %252 = vmatprep.subr.bf16.mxu0 %v155
    %253 = vmatpush1.bf16.msra.mxu0 %v154
    %254 = vmatprep.subr.bf16.mxu0 0
    %255 = vmatpush1.bf16.msra.mxu0 0
    %256 = vmatprep.subr.bf16.mxu0 0
    %257 = vmatpush1.bf16.msra.mxu0 0
    %258 = vmatprep.subr.bf16.mxu0 0
    %259 = vmatpush1.bf16.msra.mxu0 0
    %260 = vmatprep.subr.bf16.mxu0 0
    %261 = vmatpush1.bf16.msra.mxu0 0
    %262 = vmatprep.subr.bf16.mxu0 0
    %263 = vmatpush1.bf16.msra.mxu0 0
    %264 = vmatprep.subr.bf16.mxu0 0
    %265 = vmatpush1.bf16.msra.mxu0 0
    %266 = vmatprep.subr.bf16.mxu0 0
    %267 = vmatpush1.bf16.msra.mxu0 0
    %268 = vmatprep.subr.bf16.mxu0 0
    %269 = vmatpush1.bf16.msra.mxu0 0
    %270 = vmatprep.subr.bf16.mxu0 0
    %271 = vmatpush1.bf16.msra.mxu0 0
    %272 = vmatprep.subr.bf16.mxu0 0
    %273 = vmatpush1.bf16.msra.mxu0 0
    %274 = vmatprep.subr.bf16.mxu0 0
    %275 = vmatpush1.bf16.msra.mxu0 0
    %276 = vmatprep.subr.bf16.mxu0 0
    %277 = vmatpush1.bf16.msra.mxu0 0
    %278 = vmatprep.subr.bf16.mxu0 0
    %279 = vmatpush1.bf16.msra.mxu0 0
    %280 = vmatprep.subr.bf16.mxu0 0
    %281 = vmatpush1.bf16.msra.mxu0 0
    %282 = vmatprep.mubr.bf16.mxu0 0
    %283 = vmatmul.mubr.bf16.gmra.mrb[0].mxu0 %v166
    %v284 = vpop.f32.mrb[0].mxu0
    %v285 = vadd.f32 %v95, %v284
    %v286 = vpop.f32.mrb[0].mxu0
    %v287 = vadd.f32 %v99, %v286
    %v288 = vpop.f32.mrb[0].mxu0
    %v289 = vadd.f32 %v95, %v288
    %v290 = vpop.f32.mrb[0].mxu0
    %v291 = vadd.f32 %v99, %v290
    %292 = vmatprep.mubr.bf16.mxu0 0
    %293 = vmatmul.mubr.bf16.gmra.mrb[0].mxu0 %v169
    %v294 = vpop.f32.mrb[0].mxu0
    %v295 = vadd.f32 %v95, %v294
    %v296 = vpop.f32.mrb[0].mxu0
    %v297 = vadd.f32 %v99, %v296
    %v298 = vpop.f32.mrb[0].mxu0
    %v299 = vadd.f32 %v95, %v298
    %v300 = vpop.f32.mrb[0].mxu0
    %v301 = vadd.f32 %v99, %v300
    %302 = vmatprep.mubr.bf16.mxu0 0
    %303 = vmatmul.mubr.bf16.gmra.mrb[0].mxu0 %v172
    %v304 = vpop.f32.mrb[0].mxu0
    %v305 = vadd.f32 %v95, %v304
    %v306 = vpop.f32.mrb[0].mxu0
    %v307 = vadd.f32 %v99, %v306
    %v308 = vpop.f32.mrb[0].mxu0
    %v309 = vadd.f32 %v95, %v308
    %v310 = vpop.f32.mrb[0].mxu0
    %v311 = vadd.f32 %v99, %v310
    %312 = vmatprep.mubr.bf16.mxu0 0
    %313 = vmatmul.mubr.bf16.gmra.mrb[0].mxu0 %v175
    %v314 = vpop.f32.mrb[0].mxu0
    %v315 = vadd.f32 %v95, %v314
    %v316 = vpop.f32.mrb[0].mxu0
    %v317 = vadd.f32 %v99, %v316
    %v318 = vpop.f32.mrb[0].mxu0
    %v319 = vadd.f32 %v95, %v318
    %v320 = vpop.f32.mrb[0].mxu0
    %v321 = vadd.f32 %v99, %v320
    %322 = vdwg.mxu0
    %323 = vst [vmem:[#allocation2] sm:$0xff] %v212
    %324 = vst [vmem:[#allocation2 + $0x8] sm:$0xff] %v214
    %325 = vst [vmem:[#allocation2 + $0x10] sm:$0xff] %v285
    %326 = vst [vmem:[#allocation2 + $0x18] sm:$0xff] %v287
    %327 = vst [vmem:[#allocation2 + $0x20] sm:$0xff] %v216
    %328 = vst [vmem:[#allocation2 + $0x28] sm:$0xff] %v218
    %329 = vst [vmem:[#allocation2 + $0x30] sm:$0xff] %v289
    %330 = vst [vmem:[#allocation2 + $0x38] sm:$0xff] %v291
    %331 = vst [vmem:[#allocation2 + $0x40] sm:$0xff] %v222
    %332 = vst [vmem:[#allocation2 + $0x48] sm:$0xff] %v224
    %333 = vst [vmem:[#allocation2 + $0x50] sm:$0xff] %v295
    %334 = vst [vmem:[#allocation2 + $0x58] sm:$0xff] %v297
    %335 = vst [vmem:[#allocation2 + $0x60] sm:$0xff] %v226
    %336 = vst [vmem:[#allocation2 + $0x68] sm:$0xff] %v228
    %337 = vst [vmem:[#allocation2 + $0x70] sm:$0xff] %v299
    %338 = vst [vmem:[#allocation2 + $0x78] sm:$0xff] %v301
    %339 = vst [vmem:[#allocation2 + $0x80] sm:$0xff] %v232
    %340 = vst [vmem:[#allocation2 + $0x88] sm:$0xff] %v234
    %341 = vst [vmem:[#allocation2 + $0x90] sm:$0xff] %v305
    %342 = vst [vmem:[#allocation2 + $0x98] sm:$0xff] %v307
    %343 = vst [vmem:[#allocation2 + $0xa0] sm:$0xff] %v236
    %344 = vst [vmem:[#allocation2 + $0xa8] sm:$0xff] %v238
    %345 = vst [vmem:[#allocation2 + $0xb0] sm:$0xff] %v309
    %346 = vst [vmem:[#allocation2 + $0xb8] sm:$0xff] %v311
    %347 = vst [vmem:[#allocation2 + $0xc0] sm:$0xff] %v242
    %348 = vst [vmem:[#allocation2 + $0xc8] sm:$0xff] %v244
    %349 = vst [vmem:[#allocation2 + $0xd0] sm:$0xff] %v315
    %350 = vst [vmem:[#allocation2 + $0xd8] sm:$0xff] %v317
    %351 = vst [vmem:[#allocation2 + $0xe0] sm:$0xff] %v246
    %352 = vst [vmem:[#allocation2 + $0xe8] sm:$0xff] %v248
    %353 = vst [vmem:[#allocation2 + $0xf0] sm:$0xff] %v319
    %354 = vst [vmem:[#allocation2 + $0xf8] sm:$0xff] %v321
    %v355 = vld [vmem:[#allocation6] sm:$0xff]
    %v356 = vld [vmem:[#allocation6 + $0x8] sm:$0xff]
    %v357 = vld [vmem:[#allocation6 + $0x10] sm:$0xff]
    %v358 = vld [vmem:[#allocation6 + $0x18] sm:$0xff]
    %v359 = vld [vmem:[#allocation6 + $0x20] sm:$0xff]
    %v360 = vld [vmem:[#allocation6 + $0x28] sm:$0xff]
    %v361 = vld [vmem:[#allocation6 + $0x30] sm:$0xff]
    %v362 = vld [vmem:[#allocation6 + $0x38] sm:$0xff]
    %v363 = vld [vmem:[#allocation6 + $0x40] sm:$0xff]
    %v364 = vld [vmem:[#allocation6 + $0x48] sm:$0xff]
    %v365 = vld [vmem:[#allocation6 + $0x50] sm:$0xff]
    %v366 = vld [vmem:[#allocation6 + $0x58] sm:$0xff]
    %v367 = vld [vmem:[#allocation6 + $0x60] sm:$0xff]
    %v368 = vld [vmem:[#allocation6 + $0x68] sm:$0xff]
    %v369 = vld [vmem:[#allocation6 + $0x70] sm:$0xff]
    %v370 = vld [vmem:[#allocation6 + $0x78] sm:$0xff]
    %v371 = vld [vmem:[#allocation6 + $0x80] sm:$0xff]
    %v372 = vld [vmem:[#allocation6 + $0x88] sm:$0xff]
    %v373 = vld [vmem:[#allocation6 + $0x90] sm:$0xff]
    %v374 = vld [vmem:[#allocation6 + $0x98] sm:$0xff]
    %v375 = vld [vmem:[#allocation6 + $0xa0] sm:$0xff]
    %v376 = vld [vmem:[#allocation6 + $0xa8] sm:$0xff]
    %v377 = vld [vmem:[#allocation6 + $0xb0] sm:$0xff]
    %v378 = vld [vmem:[#allocation6 + $0xb8] sm:$0xff]
    %v379 = vld [vmem:[#allocation6 + $0xc0] sm:$0xff]
    %v380 = vld [vmem:[#allocation6 + $0xc8] sm:$0xff]
    %v381 = vld [vmem:[#allocation6 + $0xd0] sm:$0xff]
    %v382 = vld [vmem:[#allocation6 + $0xd8] sm:$0xff]
    %v383 = vld [vmem:[#allocation6 + $0xe0] sm:$0xff]
    %v384 = vld [vmem:[#allocation6 + $0xe8] sm:$0xff]
    %v385 = vld [vmem:[#allocation6 + $0xf0] sm:$0xff]
    %v386 = vld [vmem:[#allocation6 + $0xf8] sm:$0xff]
    %s387 = smul.u32 0, 4
    %s388 = smul.addr %s387, 8
    %s389 = scalar_lea.vmem [#allocation2], %s388
    %v390 = vld [vmem:[%s389] sm:$0xff]
    %v391 = vld [vmem:[%s389 + $0x8] sm:$0xff]
    %v392 = vld [vmem:[%s389 + $0x10] sm:$0xff]
    %v393 = vld [vmem:[%s389 + $0x18] sm:$0xff]
    %v426 = vunpack.c.l.b16 %v355
    %v427 = vunpack.c.h.b16 %v355
    %v428 = vunpack.c.l.b16 %v356
    %v429 = vunpack.c.h.b16 %v356
    %v430 = vunpack.c.l.b16 %v357
    %v431 = vunpack.c.h.b16 %v357
    %v432 = vunpack.c.l.b16 %v358
    %v433 = vunpack.c.h.b16 %v358
    %v434 = vunpack.c.l.b16 %v359
    %v435 = vunpack.c.h.b16 %v359
    %v436 = vunpack.c.l.b16 %v360
    %v437 = vunpack.c.h.b16 %v360
    %v438 = vunpack.c.l.b16 %v361
    %v439 = vunpack.c.h.b16 %v361
    %v440 = vunpack.c.l.b16 %v362
    %v441 = vunpack.c.h.b16 %v362
    %v442 = vunpack.c.l.b16 %v363
    %v443 = vunpack.c.h.b16 %v363
    %v444 = vunpack.c.l.b16 %v364
    %v445 = vunpack.c.h.b16 %v364
    %v446 = vunpack.c.l.b16 %v365
    %v447 = vunpack.c.h.b16 %v365
    %v448 = vunpack.c.l.b16 %v366
    %v449 = vunpack.c.h.b16 %v366
    %v450 = vunpack.c.l.b16 %v367
    %v451 = vunpack.c.h.b16 %v367
    %v452 = vunpack.c.l.b16 %v368
    %v453 = vunpack.c.h.b16 %v368
    %v454 = vunpack.c.l.b16 %v369
    %v455 = vunpack.c.h.b16 %v369
    %v456 = vunpack.c.l.b16 %v370
    %v457 = vunpack.c.h.b16 %v370
    %v458 = vunpack.c.l.b16 %v371
    %v459 = vunpack.c.h.b16 %v371
    %v460 = vunpack.c.l.b16 %v372
    %v461 = vunpack.c.h.b16 %v372
    %v462 = vunpack.c.l.b16 %v373
    %v463 = vunpack.c.h.b16 %v373
    %v464 = vunpack.c.l.b16 %v374
    %v465 = vunpack.c.h.b16 %v374
    %v466 = vunpack.c.l.b16 %v375
    %v467 = vunpack.c.h.b16 %v375
    %v468 = vunpack.c.l.b16 %v376
    %v469 = vunpack.c.h.b16 %v376
    %v470 = vunpack.c.l.b16 %v377
    %v471 = vunpack.c.h.b16 %v377
    %v472 = vunpack.c.l.b16 %v378
    %v473 = vunpack.c.h.b16 %v378
    %v474 = vunpack.c.l.b16 %v379
    %v475 = vunpack.c.h.b16 %v379
    %v476 = vunpack.c.l.b16 %v380
    %v477 = vunpack.c.h.b16 %v380
    %v478 = vunpack.c.l.b16 %v381
    %v479 = vunpack.c.h.b16 %v381
    %v480 = vunpack.c.l.b16 %v382
    %v481 = vunpack.c.h.b16 %v382
    %v482 = vunpack.c.l.b16 %v383
    %v483 = vunpack.c.h.b16 %v383
    %v484 = vunpack.c.l.b16 %v384
    %v485 = vunpack.c.h.b16 %v384
    %v486 = vunpack.c.l.b16 %v385
    %v487 = vunpack.c.h.b16 %v385
    %v488 = vunpack.c.l.b16 %v386
    %v489 = vunpack.c.h.b16 %v386
    %v490 = vpack.c.b16 %v430, %v426
    %v491 = vpack.c.b16 %v431, %v427
    %v492 = vpack.c.b16 %v432, %v428
    %v493 = vpack.c.b16 %v433, %v429
    %v494 = vpack.c.b16 %v438, %v434
    %v495 = vpack.c.b16 %v439, %v435
    %v496 = vpack.c.b16 %v440, %v436
    %v497 = vpack.c.b16 %v441, %v437
    %v498 = vpack.c.b16 %v446, %v442
    %v499 = vpack.c.b16 %v447, %v443
    %v500 = vpack.c.b16 %v448, %v444
    %v501 = vpack.c.b16 %v449, %v445
    %v502 = vpack.c.b16 %v454, %v450
    %v503 = vpack.c.b16 %v455, %v451
    %v504 = vpack.c.b16 %v456, %v452
    %v505 = vpack.c.b16 %v457, %v453
    %v506 = vpack.c.b16 %v462, %v458
    %v507 = vpack.c.b16 %v463, %v459
    %v508 = vpack.c.b16 %v464, %v460
    %v509 = vpack.c.b16 %v465, %v461
    %v510 = vpack.c.b16 %v470, %v466
    %v511 = vpack.c.b16 %v471, %v467
    %v512 = vpack.c.b16 %v472, %v468
    %v513 = vpack.c.b16 %v473, %v469
    %v514 = vpack.c.b16 %v478, %v474
    %v515 = vpack.c.b16 %v479, %v475
    %v516 = vpack.c.b16 %v480, %v476
    %v517 = vpack.c.b16 %v481, %v477
    %v518 = vpack.c.b16 %v486, %v482
    %v519 = vpack.c.b16 %v487, %v483
    %v520 = vpack.c.b16 %v488, %v484
    %v521 = vpack.c.b16 %v489, %v485
    %554 = vmatprep.subr.bf16.mxu0 %v491
    %555 = vmatpush1.bf16.msra.mxu0 %v490
    %556 = vmatprep.subr.bf16.mxu0 %v495
    %557 = vmatpush1.bf16.msra.mxu0 %v494
    %558 = vmatprep.subr.bf16.mxu0 %v499
    %559 = vmatpush1.bf16.msra.mxu0 %v498
    %560 = vmatprep.subr.bf16.mxu0 %v503
    %561 = vmatpush1.bf16.msra.mxu0 %v502
    %562 = vmatprep.subr.bf16.mxu0 %v507
    %563 = vmatpush1.bf16.msra.mxu0 %v506
    %564 = vmatprep.subr.bf16.mxu0 %v511
    %565 = vmatpush1.bf16.msra.mxu0 %v510
    %566 = vmatprep.subr.bf16.mxu0 %v515
    %567 = vmatpush1.bf16.msra.mxu0 %v514
    %568 = vmatprep.subr.bf16.mxu0 %v519
    %569 = vmatpush1.bf16.msra.mxu0 %v518
    %570 = vmatprep.subr.bf16.mxu0 0
    %571 = vmatpush1.bf16.msra.mxu0 0
    %572 = vmatprep.subr.bf16.mxu0 0
    %573 = vmatpush1.bf16.msra.mxu0 0
    %574 = vmatprep.subr.bf16.mxu0 0
    %575 = vmatpush1.bf16.msra.mxu0 0
    %576 = vmatprep.subr.bf16.mxu0 0
    %577 = vmatpush1.bf16.msra.mxu0 0
    %578 = vmatprep.subr.bf16.mxu0 0
    %579 = vmatpush1.bf16.msra.mxu0 0
    %580 = vmatprep.subr.bf16.mxu0 0
    %581 = vmatpush1.bf16.msra.mxu0 0
    %582 = vmatprep.subr.bf16.mxu0 0
    %583 = vmatpush1.bf16.msra.mxu0 0
    %584 = vmatprep.subr.bf16.mxu0 0
    %585 = vmatpush1.bf16.msra.mxu0 0
    %586 = vmatprep.mubr.bf16.mxu0 0
    %587 = vmatmul.mubr.bf16.gmra.mrb[0].mxu0 0
    %v588 = vpop.f32.mrb[0].mxu0
    %v589 = vadd.f32 0.0, %v588
    %v590 = vpop.f32.mrb[0].mxu0
    %v591 = vadd.f32 0.0, %v590
    %v592 = vpop.f32.mrb[0].mxu0
    %v593 = vpop.f32.mrb[0].mxu0
    %594 = vdwg.mxu0
    %595 = vmatprep.subr.bf16.mxu0 %v493
    %596 = vmatpush1.bf16.msra.mxu0 %v492
    %597 = vmatprep.subr.bf16.mxu0 %v497
    %598 = vmatpush1.bf16.msra.mxu0 %v496
    %599 = vmatprep.subr.bf16.mxu0 %v501
    %600 = vmatpush1.bf16.msra.mxu0 %v500
    %601 = vmatprep.subr.bf16.mxu0 %v505
    %602 = vmatpush1.bf16.msra.mxu0 %v504
    %603 = vmatprep.subr.bf16.mxu0 %v509
    %604 = vmatpush1.bf16.msra.mxu0 %v508
    %605 = vmatprep.subr.bf16.mxu0 %v513
    %606 = vmatpush1.bf16.msra.mxu0 %v512
    %607 = vmatprep.subr.bf16.mxu0 %v517
    %608 = vmatpush1.bf16.msra.mxu0 %v516
    %609 = vmatprep.subr.bf16.mxu0 %v521
    %610 = vmatpush1.bf16.msra.mxu0 %v520
    %611 = vmatprep.subr.bf16.mxu0 0
    %612 = vmatpush1.bf16.msra.mxu0 0
    %613 = vmatprep.subr.bf16.mxu0 0
    %614 = vmatpush1.bf16.msra.mxu0 0
    %615 = vmatprep.subr.bf16.mxu0 0
    %616 = vmatpush1.bf16.msra.mxu0 0
    %617 = vmatprep.subr.bf16.mxu0 0
    %618 = vmatpush1.bf16.msra.mxu0 0
    %619 = vmatprep.subr.bf16.mxu0 0
    %620 = vmatpush1.bf16.msra.mxu0 0
    %621 = vmatprep.subr.bf16.mxu0 0
    %622 = vmatpush1.bf16.msra.mxu0 0
    %623 = vmatprep.subr.bf16.mxu0 0
    %624 = vmatpush1.bf16.msra.mxu0 0
    %625 = vmatprep.subr.bf16.mxu0 0
    %626 = vmatpush1.bf16.msra.mxu0 0
    %627 = vmatprep.mubr.bf16.mxu0 0
    %628 = vmatmul.mubr.bf16.gmra.mrb[0].mxu0 0
    %v629 = vpop.f32.mrb[0].mxu0
    %v630 = vadd.f32 0.0, %v629
    %v631 = vpop.f32.mrb[0].mxu0
    %v632 = vadd.f32 0.0, %v631
    %v633 = vpop.f32.mrb[0].mxu0
    %v634 = vpop.f32.mrb[0].mxu0
    %635 = vdwg.mxu0
    %v636 = vadd.f32 %v390, %v589
    %v637 = vadd.f32 %v391, %v591
    %v638 = vadd.f32 %v392, %v630
    %v639 = vadd.f32 %v393, %v632
    %v640 = vxor.u32 %v636, 2147483648
    %v641 = vmul.f32 %v640, 1.442695
    %v642 = vpow.pop %v641
    %v643 = vadd.f32 %v642, 1.0
    %v644 = vrcp.pop %v643
    %v645 = vmul.f32 1.0, %v644
    %v646 = vxor.u32 %v637, 2147483648
    %v647 = vmul.f32 %v646, 1.442695
    %v648 = vpow.pop %v647
    %v649 = vadd.f32 %v648, 1.0
    %v650 = vrcp.pop %v649
    %v651 = vmul.f32 1.0, %v650
    %v652 = vtanh.pop %v638
    %v653 = vxor.u32 %v639, 2147483648
    %v654 = vmul.f32 %v653, 1.442695
    %v655 = vpow.pop %v654
    %v656 = vadd.f32 %v655, 1.0
    %v657 = vrcp.pop %v656
    %v658 = vmul.f32 1.0, %v657
    %v659 = vmul.f32 %v651, 0.0
    %v660 = vmul.f32 %v645, %v652
    %v661 = vadd.f32 %v659, %v660
    %v662 = vtanh.pop %v661
    %v663 = vmul.f32 %v658, %v662
    %v664 = vtanh.pop %v663
    %v665 = vmax.f32 %v664, -1.0
    %s666 = smul.u32 1, 4
    %s667 = smul.addr %s666, 8
    %s668 = scalar_lea.vmem [#allocation2], %s667
    %v669 = vld [vmem:[%s668] sm:$0xff]
    %v670 = vld [vmem:[%s668 + $0x8] sm:$0xff]
    %v671 = vld [vmem:[%s668 + $0x10] sm:$0xff]
    %v672 = vld [vmem:[%s668 + $0x18] sm:$0xff]
    %v673 = vpack.c.bf16 %v663, %v663
    %674 = vmatprep.subr.bf16.mxu0 %v491
    %675 = vmatpush1.bf16.msra.mxu0 %v490
    %676 = vmatprep.subr.bf16.mxu0 %v495
    %677 = vmatpush1.bf16.msra.mxu0 %v494
    %678 = vmatprep.subr.bf16.mxu0 %v499
    %679 = vmatpush1.bf16.msra.mxu0 %v498
    %680 = vmatprep.subr.bf16.mxu0 %v503
    %681 = vmatpush1.bf16.msra.mxu0 %v502
    %682 = vmatprep.subr.bf16.mxu0 %v507
    %683 = vmatpush1.bf16.msra.mxu0 %v506
    %684 = vmatprep.subr.bf16.mxu0 %v511
    %685 = vmatpush1.bf16.msra.mxu0 %v510
    %686 = vmatprep.subr.bf16.mxu0 %v515
    %687 = vmatpush1.bf16.msra.mxu0 %v514
    %688 = vmatprep.subr.bf16.mxu0 %v519
    %689 = vmatpush1.bf16.msra.mxu0 %v518
    %690 = vmatprep.subr.bf16.mxu0 0
    %691 = vmatpush1.bf16.msra.mxu0 0
    %692 = vmatprep.subr.bf16.mxu0 0
    %693 = vmatpush1.bf16.msra.mxu0 0
    %694 = vmatprep.subr.bf16.mxu0 0
    %695 = vmatpush1.bf16.msra.mxu0 0
    %696 = vmatprep.subr.bf16.mxu0 0
    %697 = vmatpush1.bf16.msra.mxu0 0
    %698 = vmatprep.subr.bf16.mxu0 0
    %699 = vmatpush1.bf16.msra.mxu0 0
    %700 = vmatprep.subr.bf16.mxu0 0
    %701 = vmatpush1.bf16.msra.mxu0 0
    %702 = vmatprep.subr.bf16.mxu0 0
    %703 = vmatpush1.bf16.msra.mxu0 0
    %704 = vmatprep.subr.bf16.mxu0 0
    %705 = vmatpush1.bf16.msra.mxu0 0
    %706 = vmatprep.mubr.bf16.mxu0 0
    %707 = vmatmul.mubr.bf16.gmra.mrb[0].mxu0 %v673
    %v708 = vpop.f32.mrb[0].mxu0
    %v709 = vadd.f32 0.0, %v708
    %v710 = vpop.f32.mrb[0].mxu0
    %v711 = vadd.f32 0.0, %v710
    %v712 = vpop.f32.mrb[0].mxu0
    %v713 = vpop.f32.mrb[0].mxu0
    %714 = vdwg.mxu0
    %715 = vmatprep.subr.bf16.mxu0 %v493
    %716 = vmatpush1.bf16.msra.mxu0 %v492
    %717 = vmatprep.subr.bf16.mxu0 %v497
    %718 = vmatpush1.bf16.msra.mxu0 %v496
    %719 = vmatprep.subr.bf16.mxu0 %v501
    %720 = vmatpush1.bf16.msra.mxu0 %v500
    %721 = vmatprep.subr.bf16.mxu0 %v505
    %722 = vmatpush1.bf16.msra.mxu0 %v504
    %723 = vmatprep.subr.bf16.mxu0 %v509
    %724 = vmatpush1.bf16.msra.mxu0 %v508
    %725 = vmatprep.subr.bf16.mxu0 %v513
    %726 = vmatpush1.bf16.msra.mxu0 %v512
    %727 = vmatprep.subr.bf16.mxu0 %v517
    %728 = vmatpush1.bf16.msra.mxu0 %v516
    %729 = vmatprep.subr.bf16.mxu0 %v521
    %730 = vmatpush1.bf16.msra.mxu0 %v520
    %731 = vmatprep.subr.bf16.mxu0 0
    %732 = vmatpush1.bf16.msra.mxu0 0
    %733 = vmatprep.subr.bf16.mxu0 0
    %734 = vmatpush1.bf16.msra.mxu0 0
    %735 = vmatprep.subr.bf16.mxu0 0
    %736 = vmatpush1.bf16.msra.mxu0 0
    %737 = vmatprep.subr.bf16.mxu0 0
    %738 = vmatpush1.bf16.msra.mxu0 0
    %739 = vmatprep.subr.bf16.mxu0 0
    %740 = vmatpush1.bf16.msra.mxu0 0
    %741 = vmatprep.subr.bf16.mxu0 0
    %742 = vmatpush1.bf16.msra.mxu0 0
    %743 = vmatprep.subr.bf16.mxu0 0
    %744 = vmatpush1.bf16.msra.mxu0 0
    %745 = vmatprep.subr.bf16.mxu0 0
    %746 = vmatpush1.bf16.msra.mxu0 0
    %747 = vmatprep.mubr.bf16.mxu0 0
    %748 = vmatmul.mubr.bf16.gmra.mrb[0].mxu0 %v673
    %v749 = vpop.f32.mrb[0].mxu0
    %v750 = vadd.f32 0.0, %v749
    %v751 = vpop.f32.mrb[0].mxu0
    %v752 = vadd.f32 0.0, %v751
    %v753 = vpop.f32.mrb[0].mxu0
    %v754 = vpop.f32.mrb[0].mxu0
    %755 = vdwg.mxu0
    %v756 = vadd.f32 %v669, %v709
    %v757 = vadd.f32 %v670, %v711
    %v758 = vadd.f32 %v671, %v750
    %v759 = vadd.f32 %v672, %v752
    %v760 = vxor.u32 %v756, 2147483648
    %v761 = vmul.f32 %v760, 1.442695
    %v762 = vpow.pop %v761
    %v763 = vadd.f32 %v762, 1.0
    %v764 = vrcp.pop %v763
    %v765 = vmul.f32 1.0, %v764
    %v766 = vxor.u32 %v757, 2147483648
    %v767 = vmul.f32 %v766, 1.442695
    %v768 = vpow.pop %v767
    %v769 = vadd.f32 %v768, 1.0
    %v770 = vrcp.pop %v769
    %v771 = vmul.f32 1.0, %v770
    %v772 = vtanh.pop %v758
    %v773 = vxor.u32 %v759, 2147483648
    %v774 = vmul.f32 %v773, 1.442695
    %v775 = vpow.pop %v774
    %v776 = vadd.f32 %v775, 1.0
    %v777 = vrcp.pop %v776
    %v778 = vmul.f32 1.0, %v777
    %v779 = vmul.f32 %v771, %v661
    %v780 = vmul.f32 %v765, %v772
    %v781 = vadd.f32 %v779, %v780
    %v782 = vtanh.pop %v781
    %v783 = vmul.f32 %v778, %v782
    %v784 = vtanh.pop %v783
    %v785 = vmax.f32 %v665, %v784
    %s786 = smul.u32 2, 4
    %s787 = smul.addr %s786, 8
    %s788 = scalar_lea.vmem [#allocation2], %s787
    %v789 = vld [vmem:[%s788] sm:$0xff]
    %v790 = vld [vmem:[%s788 + $0x8] sm:$0xff]
    %v791 = vld [vmem:[%s788 + $0x10] sm:$0xff]
    %v792 = vld [vmem:[%s788 + $0x18] sm:$0xff]
    %v793 = vpack.c.bf16 %v783, %v783
    %794 = vmatprep.subr.bf16.mxu0 %v491
    %795 = vmatpush1.bf16.msra.mxu0 %v490
    %796 = vmatprep.subr.bf16.mxu0 %v495
    %797 = vmatpush1.bf16.msra.mxu0 %v494
    %798 = vmatprep.subr.bf16.mxu0 %v499
    %799 = vmatpush1.bf16.msra.mxu0 %v498
    %800 = vmatprep.subr.bf16.mxu0 %v503
    %801 = vmatpush1.bf16.msra.mxu0 %v502
    %802 = vmatprep.subr.bf16.mxu0 %v507
    %803 = vmatpush1.bf16.msra.mxu0 %v506
    %804 = vmatprep.subr.bf16.mxu0 %v511
    %805 = vmatpush1.bf16.msra.mxu0 %v510
    %806 = vmatprep.subr.bf16.mxu0 %v515
    %807 = vmatpush1.bf16.msra.mxu0 %v514
    %808 = vmatprep.subr.bf16.mxu0 %v519
    %809 = vmatpush1.bf16.msra.mxu0 %v518
    %810 = vmatprep.subr.bf16.mxu0 0
    %811 = vmatpush1.bf16.msra.mxu0 0
    %812 = vmatprep.subr.bf16.mxu0 0
    %813 = vmatpush1.bf16.msra.mxu0 0
    %814 = vmatprep.subr.bf16.mxu0 0
    %815 = vmatpush1.bf16.msra.mxu0 0
    %816 = vmatprep.subr.bf16.mxu0 0
    %817 = vmatpush1.bf16.msra.mxu0 0
    %818 = vmatprep.subr.bf16.mxu0 0
    %819 = vmatpush1.bf16.msra.mxu0 0
    %820 = vmatprep.subr.bf16.mxu0 0
    %821 = vmatpush1.bf16.msra.mxu0 0
    %822 = vmatprep.subr.bf16.mxu0 0
    %823 = vmatpush1.bf16.msra.mxu0 0
    %824 = vmatprep.subr.bf16.mxu0 0
    %825 = vmatpush1.bf16.msra.mxu0 0
    %826 = vmatprep.mubr.bf16.mxu0 0
    %827 = vmatmul.mubr.bf16.gmra.mrb[0].mxu0 %v793
    %v828 = vpop.f32.mrb[0].mxu0
    %v829 = vadd.f32 0.0, %v828
    %v830 = vpop.f32.mrb[0].mxu0
    %v831 = vadd.f32 0.0, %v830
    %v832 = vpop.f32.mrb[0].mxu0
    %v833 = vpop.f32.mrb[0].mxu0
    %834 = vdwg.mxu0
    %835 = vmatprep.subr.bf16.mxu0 %v493
    %836 = vmatpush1.bf16.msra.mxu0 %v492
    %837 = vmatprep.subr.bf16.mxu0 %v497
    %838 = vmatpush1.bf16.msra.mxu0 %v496
    %839 = vmatprep.subr.bf16.mxu0 %v501
    %840 = vmatpush1.bf16.msra.mxu0 %v500
    %841 = vmatprep.subr.bf16.mxu0 %v505
    %842 = vmatpush1.bf16.msra.mxu0 %v504
    %843 = vmatprep.subr.bf16.mxu0 %v509
    %844 = vmatpush1.bf16.msra.mxu0 %v508
    %845 = vmatprep.subr.bf16.mxu0 %v513
    %846 = vmatpush1.bf16.msra.mxu0 %v512
    %847 = vmatprep.subr.bf16.mxu0 %v517
    %848 = vmatpush1.bf16.msra.mxu0 %v516
    %849 = vmatprep.subr.bf16.mxu0 %v521
    %850 = vmatpush1.bf16.msra.mxu0 %v520
    %851 = vmatprep.subr.bf16.mxu0 0
    %852 = vmatpush1.bf16.msra.mxu0 0
    %853 = vmatprep.subr.bf16.mxu0 0
    %854 = vmatpush1.bf16.msra.mxu0 0
    %855 = vmatprep.subr.bf16.mxu0 0
    %856 = vmatpush1.bf16.msra.mxu0 0
    %857 = vmatprep.subr.bf16.mxu0 0
    %858 = vmatpush1.bf16.msra.mxu0 0
    %859 = vmatprep.subr.bf16.mxu0 0
    %860 = vmatpush1.bf16.msra.mxu0 0
    %861 = vmatprep.subr.bf16.mxu0 0
    %862 = vmatpush1.bf16.msra.mxu0 0
    %863 = vmatprep.subr.bf16.mxu0 0
    %864 = vmatpush1.bf16.msra.mxu0 0
    %865 = vmatprep.subr.bf16.mxu0 0
    %866 = vmatpush1.bf16.msra.mxu0 0
    %867 = vmatprep.mubr.bf16.mxu0 0
    %868 = vmatmul.mubr.bf16.gmra.mrb[0].mxu0 %v793
    %v869 = vpop.f32.mrb[0].mxu0
    %v870 = vadd.f32 0.0, %v869
    %v871 = vpop.f32.mrb[0].mxu0
    %v872 = vadd.f32 0.0, %v871
    %v873 = vpop.f32.mrb[0].mxu0
    %v874 = vpop.f32.mrb[0].mxu0
    %875 = vdwg.mxu0
    %v876 = vadd.f32 %v789, %v829
    %v877 = vadd.f32 %v790, %v831
    %v878 = vadd.f32 %v791, %v870
    %v879 = vadd.f32 %v792, %v872
    %v880 = vxor.u32 %v876, 2147483648
    %v881 = vmul.f32 %v880, 1.442695
    %v882 = vpow.pop %v881
    %v883 = vadd.f32 %v882, 1.0
    %v884 = vrcp.pop %v883
    %v885 = vmul.f32 1.0, %v884
    %v886 = vxor.u32 %v877, 2147483648
    %v887 = vmul.f32 %v886, 1.442695
    %v888 = vpow.pop %v887
    %v889 = vadd.f32 %v888, 1.0
    %v890 = vrcp.pop %v889
    %v891 = vmul.f32 1.0, %v890
    %v892 = vtanh.pop %v878
    %v893 = vxor.u32 %v879, 2147483648
    %v894 = vmul.f32 %v893, 1.442695
    %v895 = vpow.pop %v894
    %v896 = vadd.f32 %v895, 1.0
    %v897 = vrcp.pop %v896
    %v898 = vmul.f32 1.0, %v897
    %v899 = vmul.f32 %v891, %v781
    %v900 = vmul.f32 %v885, %v892
    %v901 = vadd.f32 %v899, %v900
    %v902 = vtanh.pop %v901
    %v903 = vmul.f32 %v898, %v902
    %v904 = vtanh.pop %v903
    %v905 = vmax.f32 %v785, %v904
    %s906 = smul.u32 3, 4
    %s907 = smul.addr %s906, 8
    %s908 = scalar_lea.vmem [#allocation2], %s907
    %v909 = vld [vmem:[%s908] sm:$0xff]
    %v910 = vld [vmem:[%s908 + $0x8] sm:$0xff]
    %v911 = vld [vmem:[%s908 + $0x10] sm:$0xff]
    %v912 = vld [vmem:[%s908 + $0x18] sm:$0xff]
    %v913 = vpack.c.bf16 %v903, %v903
    %914 = vmatprep.subr.bf16.mxu0 %v491
    %915 = vmatpush1.bf16.msra.mxu0 %v490
    %916 = vmatprep.subr.bf16.mxu0 %v495
    %917 = vmatpush1.bf16.msra.mxu0 %v494
    %918 = vmatprep.subr.bf16.mxu0 %v499
    %919 = vmatpush1.bf16.msra.mxu0 %v498
    %920 = vmatprep.subr.bf16.mxu0 %v503
    %921 = vmatpush1.bf16.msra.mxu0 %v502
    %922 = vmatprep.subr.bf16.mxu0 %v507
    %923 = vmatpush1.bf16.msra.mxu0 %v506
    %924 = vmatprep.subr.bf16.mxu0 %v511
    %925 = vmatpush1.bf16.msra.mxu0 %v510
    %926 = vmatprep.subr.bf16.mxu0 %v515
    %927 = vmatpush1.bf16.msra.mxu0 %v514
    %928 = vmatprep.subr.bf16.mxu0 %v519
    %929 = vmatpush1.bf16.msra.mxu0 %v518
    %930 = vmatprep.subr.bf16.mxu0 0
    %931 = vmatpush1.bf16.msra.mxu0 0
    %932 = vmatprep.subr.bf16.mxu0 0
    %933 = vmatpush1.bf16.msra.mxu0 0
    %934 = vmatprep.subr.bf16.mxu0 0
    %935 = vmatpush1.bf16.msra.mxu0 0
    %936 = vmatprep.subr.bf16.mxu0 0
    %937 = vmatpush1.bf16.msra.mxu0 0
    %938 = vmatprep.subr.bf16.mxu0 0
    %939 = vmatpush1.bf16.msra.mxu0 0
    %940 = vmatprep.subr.bf16.mxu0 0
    %941 = vmatpush1.bf16.msra.mxu0 0
    %942 = vmatprep.subr.bf16.mxu0 0
    %943 = vmatpush1.bf16.msra.mxu0 0
    %944 = vmatprep.subr.bf16.mxu0 0
    %945 = vmatpush1.bf16.msra.mxu0 0
    %946 = vmatprep.mubr.bf16.mxu0 0
    %947 = vmatmul.mubr.bf16.gmra.mrb[0].mxu0 %v913
    %v948 = vpop.f32.mrb[0].mxu0
    %v949 = vadd.f32 0.0, %v948
    %v950 = vpop.f32.mrb[0].mxu0
    %v951 = vadd.f32 0.0, %v950
    %v952 = vpop.f32.mrb[0].mxu0
    %v953 = vpop.f32.mrb[0].mxu0
    %954 = vdwg.mxu0
    %955 = vmatprep.subr.bf16.mxu0 %v493
    %956 = vmatpush1.bf16.msra.mxu0 %v492
    %957 = vmatprep.subr.bf16.mxu0 %v497
    %958 = vmatpush1.bf16.msra.mxu0 %v496
    %959 = vmatprep.subr.bf16.mxu0 %v501
    %960 = vmatpush1.bf16.msra.mxu0 %v500
    %961 = vmatprep.subr.bf16.mxu0 %v505
    %962 = vmatpush1.bf16.msra.mxu0 %v504
    %963 = vmatprep.subr.bf16.mxu0 %v509
    %964 = vmatpush1.bf16.msra.mxu0 %v508
    %965 = vmatprep.subr.bf16.mxu0 %v513
    %966 = vmatpush1.bf16.msra.mxu0 %v512
    %967 = vmatprep.subr.bf16.mxu0 %v517
    %968 = vmatpush1.bf16.msra.mxu0 %v516
    %969 = vmatprep.subr.bf16.mxu0 %v521
    %970 = vmatpush1.bf16.msra.mxu0 %v520
    %971 = vmatprep.subr.bf16.mxu0 0
    %972 = vmatpush1.bf16.msra.mxu0 0
    %973 = vmatprep.subr.bf16.mxu0 0
    %974 = vmatpush1.bf16.msra.mxu0 0
    %975 = vmatprep.subr.bf16.mxu0 0
    %976 = vmatpush1.bf16.msra.mxu0 0
    %977 = vmatprep.subr.bf16.mxu0 0
    %978 = vmatpush1.bf16.msra.mxu0 0
    %979 = vmatprep.subr.bf16.mxu0 0
    %980 = vmatpush1.bf16.msra.mxu0 0
    %981 = vmatprep.subr.bf16.mxu0 0
    %982 = vmatpush1.bf16.msra.mxu0 0
    %983 = vmatprep.subr.bf16.mxu0 0
    %984 = vmatpush1.bf16.msra.mxu0 0
    %985 = vmatprep.subr.bf16.mxu0 0
    %986 = vmatpush1.bf16.msra.mxu0 0
    %987 = vmatprep.mubr.bf16.mxu0 0
    %988 = vmatmul.mubr.bf16.gmra.mrb[0].mxu0 %v913
    %v989 = vpop.f32.mrb[0].mxu0
    %v990 = vadd.f32 0.0, %v989
    %v991 = vpop.f32.mrb[0].mxu0
    %v992 = vadd.f32 0.0, %v991
    %v993 = vpop.f32.mrb[0].mxu0
    %v994 = vpop.f32.mrb[0].mxu0
    %995 = vdwg.mxu0
    %v996 = vadd.f32 %v909, %v949
    %v997 = vadd.f32 %v910, %v951
    %v998 = vadd.f32 %v911, %v990
    %v999 = vadd.f32 %v912, %v992
    %v1000 = vxor.u32 %v996, 2147483648
    %v1001 = vmul.f32 %v1000, 1.442695
    %v1002 = vpow.pop %v1001
    %v1003 = vadd.f32 %v1002, 1.0
    %v1004 = vrcp.pop %v1003
    %v1005 = vmul.f32 1.0, %v1004
    %v1006 = vxor.u32 %v997, 2147483648
    %v1007 = vmul.f32 %v1006, 1.442695
    %v1008 = vpow.pop %v1007
    %v1009 = vadd.f32 %v1008, 1.0
    %v1010 = vrcp.pop %v1009
    %v1011 = vmul.f32 1.0, %v1010
    %v1012 = vtanh.pop %v998
    %v1013 = vxor.u32 %v999, 2147483648
    %v1014 = vmul.f32 %v1013, 1.442695
    %v1015 = vpow.pop %v1014
    %v1016 = vadd.f32 %v1015, 1.0
    %v1017 = vrcp.pop %v1016
    %v1018 = vmul.f32 1.0, %v1017
    %v1019 = vmul.f32 %v1011, %v901
    %v1020 = vmul.f32 %v1005, %v1012
    %v1021 = vadd.f32 %v1019, %v1020
    %v1022 = vtanh.pop %v1021
    %v1023 = vmul.f32 %v1018, %v1022
    %v1024 = vtanh.pop %v1023
    %v1025 = vmax.f32 %v905, %v1024
    %s1026 = smul.u32 4, 4
    %s1027 = smul.addr %s1026, 8
    %s1028 = scalar_lea.vmem [#allocation2], %s1027
    %v1029 = vld [vmem:[%s1028] sm:$0xff]
    %v1030 = vld [vmem:[%s1028 + $0x8] sm:$0xff]
    %v1031 = vld [vmem:[%s1028 + $0x10] sm:$0xff]
    %v1032 = vld [vmem:[%s1028 + $0x18] sm:$0xff]
    %v1033 = vpack.c.bf16 %v1023, %v1023
    %1034 = vmatprep.subr.bf16.mxu0 %v491
    %1035 = vmatpush1.bf16.msra.mxu0 %v490
    %1036 = vmatprep.subr.bf16.mxu0 %v495
    %1037 = vmatpush1.bf16.msra.mxu0 %v494
    %1038 = vmatprep.subr.bf16.mxu0 %v499
    %1039 = vmatpush1.bf16.msra.mxu0 %v498
    %1040 = vmatprep.subr.bf16.mxu0 %v503
    %1041 = vmatpush1.bf16.msra.mxu0 %v502
    %1042 = vmatprep.subr.bf16.mxu0 %v507
    %1043 = vmatpush1.bf16.msra.mxu0 %v506
    %1044 = vmatprep.subr.bf16.mxu0 %v511
    %1045 = vmatpush1.bf16.msra.mxu0 %v510
    %1046 = vmatprep.subr.bf16.mxu0 %v515
    %1047 = vmatpush1.bf16.msra.mxu0 %v514
    %1048 = vmatprep.subr.bf16.mxu0 %v519
    %1049 = vmatpush1.bf16.msra.mxu0 %v518
    %1050 = vmatprep.subr.bf16.mxu0 0
    %1051 = vmatpush1.bf16.msra.mxu0 0
    %1052 = vmatprep.subr.bf16.mxu0 0
    %1053 = vmatpush1.bf16.msra.mxu0 0
    %1054 = vmatprep.subr.bf16.mxu0 0
    %1055 = vmatpush1.bf16.msra.mxu0 0
    %1056 = vmatprep.subr.bf16.mxu0 0
    %1057 = vmatpush1.bf16.msra.mxu0 0
    %1058 = vmatprep.subr.bf16.mxu0 0
    %1059 = vmatpush1.bf16.msra.mxu0 0
    %1060 = vmatprep.subr.bf16.mxu0 0
    %1061 = vmatpush1.bf16.msra.mxu0 0
    %1062 = vmatprep.subr.bf16.mxu0 0
    %1063 = vmatpush1.bf16.msra.mxu0 0
    %1064 = vmatprep.subr.bf16.mxu0 0
    %1065 = vmatpush1.bf16.msra.mxu0 0
    %1066 = vmatprep.mubr.bf16.mxu0 0
    %1067 = vmatmul.mubr.bf16.gmra.mrb[0].mxu0 %v1033
    %v1068 = vpop.f32.mrb[0].mxu0
    %v1069 = vadd.f32 0.0, %v1068
    %v1070 = vpop.f32.mrb[0].mxu0
    %v1071 = vadd.f32 0.0, %v1070
    %v1072 = vpop.f32.mrb[0].mxu0
    %v1073 = vpop.f32.mrb[0].mxu0
    %1074 = vdwg.mxu0
    %1075 = vmatprep.subr.bf16.mxu0 %v493
    %1076 = vmatpush1.bf16.msra.mxu0 %v492
    %1077 = vmatprep.subr.bf16.mxu0 %v497
    %1078 = vmatpush1.bf16.msra.mxu0 %v496
    %1079 = vmatprep.subr.bf16.mxu0 %v501
    %1080 = vmatpush1.bf16.msra.mxu0 %v500
    %1081 = vmatprep.subr.bf16.mxu0 %v505
    %1082 = vmatpush1.bf16.msra.mxu0 %v504
    %1083 = vmatprep.subr.bf16.mxu0 %v509
    %1084 = vmatpush1.bf16.msra.mxu0 %v508
    %1085 = vmatprep.subr.bf16.mxu0 %v513
    %1086 = vmatpush1.bf16.msra.mxu0 %v512
    %1087 = vmatprep.subr.bf16.mxu0 %v517
    %1088 = vmatpush1.bf16.msra.mxu0 %v516
    %1089 = vmatprep.subr.bf16.mxu0 %v521
    %1090 = vmatpush1.bf16.msra.mxu0 %v520
    %1091 = vmatprep.subr.bf16.mxu0 0
    %1092 = vmatpush1.bf16.msra.mxu0 0
    %1093 = vmatprep.subr.bf16.mxu0 0
    %1094 = vmatpush1.bf16.msra.mxu0 0
    %1095 = vmatprep.subr.bf16.mxu0 0
    %1096 = vmatpush1.bf16.msra.mxu0 0
    %1097 = vmatprep.subr.bf16.mxu0 0
    %1098 = vmatpush1.bf16.msra.mxu0 0
    %1099 = vmatprep.subr.bf16.mxu0 0
    %1100 = vmatpush1.bf16.msra.mxu0 0
    %1101 = vmatprep.subr.bf16.mxu0 0
    %1102 = vmatpush1.bf16.msra.mxu0 0
    %1103 = vmatprep.subr.bf16.mxu0 0
    %1104 = vmatpush1.bf16.msra.mxu0 0
    %1105 = vmatprep.subr.bf16.mxu0 0
    %1106 = vmatpush1.bf16.msra.mxu0 0
    %1107 = vmatprep.mubr.bf16.mxu0 0
    %1108 = vmatmul.mubr.bf16.gmra.mrb[0].mxu0 %v1033
    %v1109 = vpop.f32.mrb[0].mxu0
    %v1110 = vadd.f32 0.0, %v1109
    %v1111 = vpop.f32.mrb[0].mxu0
    %v1112 = vadd.f32 0.0, %v1111
    %v1113 = vpop.f32.mrb[0].mxu0
    %v1114 = vpop.f32.mrb[0].mxu0
    %1115 = vdwg.mxu0
    %v1116 = vadd.f32 %v1029, %v1069
    %v1117 = vadd.f32 %v1030, %v1071
    %v1118 = vadd.f32 %v1031, %v1110
    %v1119 = vadd.f32 %v1032, %v1112
    %v1120 = vxor.u32 %v1116, 2147483648
    %v1121 = vmul.f32 %v1120, 1.442695
    %v1122 = vpow.pop %v1121
    %v1123 = vadd.f32 %v1122, 1.0
    %v1124 = vrcp.pop %v1123
    %v1125 = vmul.f32 1.0, %v1124
    %v1126 = vxor.u32 %v1117, 2147483648
    %v1127 = vmul.f32 %v1126, 1.442695
    %v1128 = vpow.pop %v1127
    %v1129 = vadd.f32 %v1128, 1.0
    %v1130 = vrcp.pop %v1129
    %v1131 = vmul.f32 1.0, %v1130
    %v1132 = vtanh.pop %v1118
    %v1133 = vxor.u32 %v1119, 2147483648
    %v1134 = vmul.f32 %v1133, 1.442695
    %v1135 = vpow.pop %v1134
    %v1136 = vadd.f32 %v1135, 1.0
    %v1137 = vrcp.pop %v1136
    %v1138 = vmul.f32 1.0, %v1137
    %v1139 = vmul.f32 %v1131, %v1021
    %v1140 = vmul.f32 %v1125, %v1132
    %v1141 = vadd.f32 %v1139, %v1140
    %v1142 = vtanh.pop %v1141
    %v1143 = vmul.f32 %v1138, %v1142
    %v1144 = vtanh.pop %v1143
    %v1145 = vmax.f32 %v1025, %v1144
    %s1146 = smul.u32 5, 4
    %s1147 = smul.addr %s1146, 8
    %s1148 = scalar_lea.vmem [#allocation2], %s1147
    %v1149 = vld [vmem:[%s1148] sm:$0xff]
    %v1150 = vld [vmem:[%s1148 + $0x8] sm:$0xff]
    %v1151 = vld [vmem:[%s1148 + $0x10] sm:$0xff]
    %v1152 = vld [vmem:[%s1148 + $0x18] sm:$0xff]
    %v1153 = vpack.c.bf16 %v1143, %v1143
    %1154 = vmatprep.subr.bf16.mxu0 %v491
    %1155 = vmatpush1.bf16.msra.mxu0 %v490
    %1156 = vmatprep.subr.bf16.mxu0 %v495
    %1157 = vmatpush1.bf16.msra.mxu0 %v494
    %1158 = vmatprep.subr.bf16.mxu0 %v499
    %1159 = vmatpush1.bf16.msra.mxu0 %v498
    %1160 = vmatprep.subr.bf16.mxu0 %v503
    %1161 = vmatpush1.bf16.msra.mxu0 %v502
    %1162 = vmatprep.subr.bf16.mxu0 %v507
    %1163 = vmatpush1.bf16.msra.mxu0 %v506
    %1164 = vmatprep.subr.bf16.mxu0 %v511
    %1165 = vmatpush1.bf16.msra.mxu0 %v510
    %1166 = vmatprep.subr.bf16.mxu0 %v515
    %1167 = vmatpush1.bf16.msra.mxu0 %v514
    %1168 = vmatprep.subr.bf16.mxu0 %v519
    %1169 = vmatpush1.bf16.msra.mxu0 %v518
    %1170 = vmatprep.subr.bf16.mxu0 0
    %1171 = vmatpush1.bf16.msra.mxu0 0
    %1172 = vmatprep.subr.bf16.mxu0 0
    %1173 = vmatpush1.bf16.msra.mxu0 0
    %1174 = vmatprep.subr.bf16.mxu0 0
    %1175 = vmatpush1.bf16.msra.mxu0 0
    %1176 = vmatprep.subr.bf16.mxu0 0
    %1177 = vmatpush1.bf16.msra.mxu0 0
    %1178 = vmatprep.subr.bf16.mxu0 0
    %1179 = vmatpush1.bf16.msra.mxu0 0
    %1180 = vmatprep.subr.bf16.mxu0 0
    %1181 = vmatpush1.bf16.msra.mxu0 0
    %1182 = vmatprep.subr.bf16.mxu0 0
    %1183 = vmatpush1.bf16.msra.mxu0 0
    %1184 = vmatprep.subr.bf16.mxu0 0
    %1185 = vmatpush1.bf16.msra.mxu0 0
    %1186 = vmatprep.mubr.bf16.mxu0 0
    %1187 = vmatmul.mubr.bf16.gmra.mrb[0].mxu0 %v1153
    %v1188 = vpop.f32.mrb[0].mxu0
    %v1189 = vadd.f32 0.0, %v1188
    %v1190 = vpop.f32.mrb[0].mxu0
    %v1191 = vadd.f32 0.0, %v1190
    %v1192 = vpop.f32.mrb[0].mxu0
    %v1193 = vpop.f32.mrb[0].mxu0
    %1194 = vdwg.mxu0
    %1195 = vmatprep.subr.bf16.mxu0 %v493
    %1196 = vmatpush1.bf16.msra.mxu0 %v492
    %1197 = vmatprep.subr.bf16.mxu0 %v497
    %1198 = vmatpush1.bf16.msra.mxu0 %v496
    %1199 = vmatprep.subr.bf16.mxu0 %v501
    %1200 = vmatpush1.bf16.msra.mxu0 %v500
    %1201 = vmatprep.subr.bf16.mxu0 %v505
    %1202 = vmatpush1.bf16.msra.mxu0 %v504
    %1203 = vmatprep.subr.bf16.mxu0 %v509
    %1204 = vmatpush1.bf16.msra.mxu0 %v508
    %1205 = vmatprep.subr.bf16.mxu0 %v513
    %1206 = vmatpush1.bf16.msra.mxu0 %v512
    %1207 = vmatprep.subr.bf16.mxu0 %v517
    %1208 = vmatpush1.bf16.msra.mxu0 %v516
    %1209 = vmatprep.subr.bf16.mxu0 %v521
    %1210 = vmatpush1.bf16.msra.mxu0 %v520
    %1211 = vmatprep.subr.bf16.mxu0 0
    %1212 = vmatpush1.bf16.msra.mxu0 0
    %1213 = vmatprep.subr.bf16.mxu0 0
    %1214 = vmatpush1.bf16.msra.mxu0 0
    %1215 = vmatprep.subr.bf16.mxu0 0
    %1216 = vmatpush1.bf16.msra.mxu0 0
    %1217 = vmatprep.subr.bf16.mxu0 0
    %1218 = vmatpush1.bf16.msra.mxu0 0
    %1219 = vmatprep.subr.bf16.mxu0 0
    %1220 = vmatpush1.bf16.msra.mxu0 0
    %1221 = vmatprep.subr.bf16.mxu0 0
    %1222 = vmatpush1.bf16.msra.mxu0 0
    %1223 = vmatprep.subr.bf16.mxu0 0
    %1224 = vmatpush1.bf16.msra.mxu0 0
    %1225 = vmatprep.subr.bf16.mxu0 0
    %1226 = vmatpush1.bf16.msra.mxu0 0
    %1227 = vmatprep.mubr.bf16.mxu0 0
    %1228 = vmatmul.mubr.bf16.gmra.mrb[0].mxu0 %v1153
    %v1229 = vpop.f32.mrb[0].mxu0
    %v1230 = vadd.f32 0.0, %v1229
    %v1231 = vpop.f32.mrb[0].mxu0
    %v1232 = vadd.f32 0.0, %v1231
    %v1233 = vpop.f32.mrb[0].mxu0
    %v1234 = vpop.f32.mrb[0].mxu0
    %1235 = vdwg.mxu0
    %v1236 = vadd.f32 %v1149, %v1189
    %v1237 = vadd.f32 %v1150, %v1191
    %v1238 = vadd.f32 %v1151, %v1230
    %v1239 = vadd.f32 %v1152, %v1232
    %v1240 = vxor.u32 %v1236, 2147483648
    %v1241 = vmul.f32 %v1240, 1.442695
    %v1242 = vpow.pop %v1241
    %v1243 = vadd.f32 %v1242, 1.0
    %v1244 = vrcp.pop %v1243
    %v1245 = vmul.f32 1.0, %v1244
    %v1246 = vxor.u32 %v1237, 2147483648
    %v1247 = vmul.f32 %v1246, 1.442695
    %v1248 = vpow.pop %v1247
    %v1249 = vadd.f32 %v1248, 1.0
    %v1250 = vrcp.pop %v1249
    %v1251 = vmul.f32 1.0, %v1250
    %v1252 = vtanh.pop %v1238
    %v1253 = vxor.u32 %v1239, 2147483648
    %v1254 = vmul.f32 %v1253, 1.442695
    %v1255 = vpow.pop %v1254
    %v1256 = vadd.f32 %v1255, 1.0
    %v1257 = vrcp.pop %v1256
    %v1258 = vmul.f32 1.0, %v1257
    %v1259 = vmul.f32 %v1251, %v1141
    %v1260 = vmul.f32 %v1245, %v1252
    %v1261 = vadd.f32 %v1259, %v1260
    %v1262 = vtanh.pop %v1261
    %v1263 = vmul.f32 %v1258, %v1262
    %v1264 = vtanh.pop %v1263
    %v1265 = vmax.f32 %v1145, %v1264
    %s1266 = smul.u32 6, 4
    %s1267 = smul.addr %s1266, 8
    %s1268 = scalar_lea.vmem [#allocation2], %s1267
    %v1269 = vld [vmem:[%s1268] sm:$0xff]
    %v1270 = vld [vmem:[%s1268 + $0x8] sm:$0xff]
    %v1271 = vld [vmem:[%s1268 + $0x10] sm:$0xff]
    %v1272 = vld [vmem:[%s1268 + $0x18] sm:$0xff]
    %v1273 = vpack.c.bf16 %v1263, %v1263
    %1274 = vmatprep.subr.bf16.mxu0 %v491
    %1275 = vmatpush1.bf16.msra.mxu0 %v490
    %1276 = vmatprep.subr.bf16.mxu0 %v495
    %1277 = vmatpush1.bf16.msra.mxu0 %v494
    %1278 = vmatprep.subr.bf16.mxu0 %v499
    %1279 = vmatpush1.bf16.msra.mxu0 %v498
    %1280 = vmatprep.subr.bf16.mxu0 %v503
    %1281 = vmatpush1.bf16.msra.mxu0 %v502
    %1282 = vmatprep.subr.bf16.mxu0 %v507
    %1283 = vmatpush1.bf16.msra.mxu0 %v506
    %1284 = vmatprep.subr.bf16.mxu0 %v511
    %1285 = vmatpush1.bf16.msra.mxu0 %v510
    %1286 = vmatprep.subr.bf16.mxu0 %v515
    %1287 = vmatpush1.bf16.msra.mxu0 %v514
    %1288 = vmatprep.subr.bf16.mxu0 %v519
    %1289 = vmatpush1.bf16.msra.mxu0 %v518
    %1290 = vmatprep.subr.bf16.mxu0 0
    %1291 = vmatpush1.bf16.msra.mxu0 0
    %1292 = vmatprep.subr.bf16.mxu0 0
    %1293 = vmatpush1.bf16.msra.mxu0 0
    %1294 = vmatprep.subr.bf16.mxu0 0
    %1295 = vmatpush1.bf16.msra.mxu0 0
    %1296 = vmatprep.subr.bf16.mxu0 0
    %1297 = vmatpush1.bf16.msra.mxu0 0
    %1298 = vmatprep.subr.bf16.mxu0 0
    %1299 = vmatpush1.bf16.msra.mxu0 0
    %1300 = vmatprep.subr.bf16.mxu0 0
    %1301 = vmatpush1.bf16.msra.mxu0 0
    %1302 = vmatprep.subr.bf16.mxu0 0
    %1303 = vmatpush1.bf16.msra.mxu0 0
    %1304 = vmatprep.subr.bf16.mxu0 0
    %1305 = vmatpush1.bf16.msra.mxu0 0
    %1306 = vmatprep.mubr.bf16.mxu0 0
    %1307 = vmatmul.mubr.bf16.gmra.mrb[0].mxu0 %v1273
    %v1308 = vpop.f32.mrb[0].mxu0
    %v1309 = vadd.f32 0.0, %v1308
    %v1310 = vpop.f32.mrb[0].mxu0
    %v1311 = vadd.f32 0.0, %v1310
    %v1312 = vpop.f32.mrb[0].mxu0
    %v1313 = vpop.f32.mrb[0].mxu0
    %1314 = vdwg.mxu0
    %1315 = vmatprep.subr.bf16.mxu0 %v493
    %1316 = vmatpush1.bf16.msra.mxu0 %v492
    %1317 = vmatprep.subr.bf16.mxu0 %v497
    %1318 = vmatpush1.bf16.msra.mxu0 %v496
    %1319 = vmatprep.subr.bf16.mxu0 %v501
    %1320 = vmatpush1.bf16.msra.mxu0 %v500
    %1321 = vmatprep.subr.bf16.mxu0 %v505
    %1322 = vmatpush1.bf16.msra.mxu0 %v504
    %1323 = vmatprep.subr.bf16.mxu0 %v509
    %1324 = vmatpush1.bf16.msra.mxu0 %v508
    %1325 = vmatprep.subr.bf16.mxu0 %v513
    %1326 = vmatpush1.bf16.msra.mxu0 %v512
    %1327 = vmatprep.subr.bf16.mxu0 %v517
    %1328 = vmatpush1.bf16.msra.mxu0 %v516
    %1329 = vmatprep.subr.bf16.mxu0 %v521
    %1330 = vmatpush1.bf16.msra.mxu0 %v520
    %1331 = vmatprep.subr.bf16.mxu0 0
    %1332 = vmatpush1.bf16.msra.mxu0 0
    %1333 = vmatprep.subr.bf16.mxu0 0
    %1334 = vmatpush1.bf16.msra.mxu0 0
    %1335 = vmatprep.subr.bf16.mxu0 0
    %1336 = vmatpush1.bf16.msra.mxu0 0
    %1337 = vmatprep.subr.bf16.mxu0 0
    %1338 = vmatpush1.bf16.msra.mxu0 0
    %1339 = vmatprep.subr.bf16.mxu0 0
    %1340 = vmatpush1.bf16.msra.mxu0 0
    %1341 = vmatprep.subr.bf16.mxu0 0
    %1342 = vmatpush1.bf16.msra.mxu0 0
    %1343 = vmatprep.subr.bf16.mxu0 0
    %1344 = vmatpush1.bf16.msra.mxu0 0
    %1345 = vmatprep.subr.bf16.mxu0 0
    %1346 = vmatpush1.bf16.msra.mxu0 0
    %1347 = vmatprep.mubr.bf16.mxu0 0
    %1348 = vmatmul.mubr.bf16.gmra.mrb[0].mxu0 %v1273
    %v1349 = vpop.f32.mrb[0].mxu0
    %v1350 = vadd.f32 0.0, %v1349
    %v1351 = vpop.f32.mrb[0].mxu0
    %v1352 = vadd.f32 0.0, %v1351
    %v1353 = vpop.f32.mrb[0].mxu0
    %v1354 = vpop.f32.mrb[0].mxu0
    %1355 = vdwg.mxu0
    %v1356 = vadd.f32 %v1269, %v1309
    %v1357 = vadd.f32 %v1270, %v1311
    %v1358 = vadd.f32 %v1271, %v1350
    %v1359 = vadd.f32 %v1272, %v1352
    %v1360 = vxor.u32 %v1356, 2147483648
    %v1361 = vmul.f32 %v1360, 1.442695
    %v1362 = vpow.pop %v1361
    %v1363 = vadd.f32 %v1362, 1.0
    %v1364 = vrcp.pop %v1363
    %v1365 = vmul.f32 1.0, %v1364
    %v1366 = vxor.u32 %v1357, 2147483648
    %v1367 = vmul.f32 %v1366, 1.442695
    %v1368 = vpow.pop %v1367
    %v1369 = vadd.f32 %v1368, 1.0
    %v1370 = vrcp.pop %v1369
    %v1371 = vmul.f32 1.0, %v1370
    %v1372 = vtanh.pop %v1358
    %v1373 = vxor.u32 %v1359, 2147483648
    %v1374 = vmul.f32 %v1373, 1.442695
    %v1375 = vpow.pop %v1374
    %v1376 = vadd.f32 %v1375, 1.0
    %v1377 = vrcp.pop %v1376
    %v1378 = vmul.f32 1.0, %v1377
    %v1379 = vmul.f32 %v1371, %v1261
    %v1380 = vmul.f32 %v1365, %v1372
    %v1381 = vadd.f32 %v1379, %v1380
    %v1382 = vtanh.pop %v1381
    %v1383 = vmul.f32 %v1378, %v1382
    %v1384 = vtanh.pop %v1383
    %v1385 = vmax.f32 %v1265, %v1384
    %s1386 = smul.u32 7, 4
    %s1387 = smul.addr %s1386, 8
    %s1388 = scalar_lea.vmem [#allocation2], %s1387
    %v1389 = vld [vmem:[%s1388] sm:$0xff]
    %v1390 = vld [vmem:[%s1388 + $0x8] sm:$0xff]
    %v1391 = vld [vmem:[%s1388 + $0x10] sm:$0xff]
    %v1392 = vld [vmem:[%s1388 + $0x18] sm:$0xff]
    %v1393 = vpack.c.bf16 %v1383, %v1383
    %1394 = vmatprep.subr.bf16.mxu0 %v491
    %1395 = vmatpush1.bf16.msra.mxu0 %v490
    %1396 = vmatprep.subr.bf16.mxu0 %v495
    %1397 = vmatpush1.bf16.msra.mxu0 %v494
    %1398 = vmatprep.subr.bf16.mxu0 %v499
    %1399 = vmatpush1.bf16.msra.mxu0 %v498
    %1400 = vmatprep.subr.bf16.mxu0 %v503
    %1401 = vmatpush1.bf16.msra.mxu0 %v502
    %1402 = vmatprep.subr.bf16.mxu0 %v507
    %1403 = vmatpush1.bf16.msra.mxu0 %v506
    %1404 = vmatprep.subr.bf16.mxu0 %v511
    %1405 = vmatpush1.bf16.msra.mxu0 %v510
    %1406 = vmatprep.subr.bf16.mxu0 %v515
    %1407 = vmatpush1.bf16.msra.mxu0 %v514
    %1408 = vmatprep.subr.bf16.mxu0 %v519
    %1409 = vmatpush1.bf16.msra.mxu0 %v518
    %1410 = vmatprep.subr.bf16.mxu0 0
    %1411 = vmatpush1.bf16.msra.mxu0 0
    %1412 = vmatprep.subr.bf16.mxu0 0
    %1413 = vmatpush1.bf16.msra.mxu0 0
    %1414 = vmatprep.subr.bf16.mxu0 0
    %1415 = vmatpush1.bf16.msra.mxu0 0
    %1416 = vmatprep.subr.bf16.mxu0 0
    %1417 = vmatpush1.bf16.msra.mxu0 0
    %1418 = vmatprep.subr.bf16.mxu0 0
    %1419 = vmatpush1.bf16.msra.mxu0 0
    %1420 = vmatprep.subr.bf16.mxu0 0
    %1421 = vmatpush1.bf16.msra.mxu0 0
    %1422 = vmatprep.subr.bf16.mxu0 0
    %1423 = vmatpush1.bf16.msra.mxu0 0
    %1424 = vmatprep.subr.bf16.mxu0 0
    %1425 = vmatpush1.bf16.msra.mxu0 0
    %1426 = vmatprep.mubr.bf16.mxu0 0
    %1427 = vmatmul.mubr.bf16.gmra.mrb[0].mxu0 %v1393
    %v1428 = vpop.f32.mrb[0].mxu0
    %v1429 = vadd.f32 0.0, %v1428
    %v1430 = vpop.f32.mrb[0].mxu0
    %v1431 = vadd.f32 0.0, %v1430
    %v1432 = vpop.f32.mrb[0].mxu0
    %v1433 = vpop.f32.mrb[0].mxu0
    %1434 = vdwg.mxu0
    %1435 = vmatprep.subr.bf16.mxu0 %v493
    %1436 = vmatpush1.bf16.msra.mxu0 %v492
    %1437 = vmatprep.subr.bf16.mxu0 %v497
    %1438 = vmatpush1.bf16.msra.mxu0 %v496
    %1439 = vmatprep.subr.bf16.mxu0 %v501
    %1440 = vmatpush1.bf16.msra.mxu0 %v500
    %1441 = vmatprep.subr.bf16.mxu0 %v505
    %1442 = vmatpush1.bf16.msra.mxu0 %v504
    %1443 = vmatprep.subr.bf16.mxu0 %v509
    %1444 = vmatpush1.bf16.msra.mxu0 %v508
    %1445 = vmatprep.subr.bf16.mxu0 %v513
    %1446 = vmatpush1.bf16.msra.mxu0 %v512
    %1447 = vmatprep.subr.bf16.mxu0 %v517
    %1448 = vmatpush1.bf16.msra.mxu0 %v516
    %1449 = vmatprep.subr.bf16.mxu0 %v521
    %1450 = vmatpush1.bf16.msra.mxu0 %v520
    %1451 = vmatprep.subr.bf16.mxu0 0
    %1452 = vmatpush1.bf16.msra.mxu0 0
    %1453 = vmatprep.subr.bf16.mxu0 0
    %1454 = vmatpush1.bf16.msra.mxu0 0
    %1455 = vmatprep.subr.bf16.mxu0 0
    %1456 = vmatpush1.bf16.msra.mxu0 0
    %1457 = vmatprep.subr.bf16.mxu0 0
    %1458 = vmatpush1.bf16.msra.mxu0 0
    %1459 = vmatprep.subr.bf16.mxu0 0
    %1460 = vmatpush1.bf16.msra.mxu0 0
    %1461 = vmatprep.subr.bf16.mxu0 0
    %1462 = vmatpush1.bf16.msra.mxu0 0
    %1463 = vmatprep.subr.bf16.mxu0 0
    %1464 = vmatpush1.bf16.msra.mxu0 0
    %1465 = vmatprep.subr.bf16.mxu0 0
    %1466 = vmatpush1.bf16.msra.mxu0 0
    %1467 = vmatprep.mubr.bf16.mxu0 0
    %1468 = vmatmul.mubr.bf16.gmra.mrb[0].mxu0 %v1393
    %v1469 = vpop.f32.mrb[0].mxu0
    %v1470 = vadd.f32 0.0, %v1469
    %v1471 = vpop.f32.mrb[0].mxu0
    %v1472 = vadd.f32 0.0, %v1471
    %v1473 = vpop.f32.mrb[0].mxu0
    %v1474 = vpop.f32.mrb[0].mxu0
    %1475 = vdwg.mxu0
    %v1476 = vadd.f32 %v1389, %v1429
    %v1477 = vadd.f32 %v1390, %v1431
    %v1478 = vadd.f32 %v1391, %v1470
    %v1479 = vadd.f32 %v1392, %v1472
    %v1480 = vxor.u32 %v1476, 2147483648
    %v1481 = vmul.f32 %v1480, 1.442695
    %v1482 = vpow.pop %v1481
    %v1483 = vadd.f32 %v1482, 1.0
    %v1484 = vrcp.pop %v1483
    %v1485 = vmul.f32 1.0, %v1484
    %v1486 = vxor.u32 %v1477, 2147483648
    %v1487 = vmul.f32 %v1486, 1.442695
    %v1488 = vpow.pop %v1487
    %v1489 = vadd.f32 %v1488, 1.0
    %v1490 = vrcp.pop %v1489
    %v1491 = vmul.f32 1.0, %v1490
    %v1492 = vtanh.pop %v1478
    %v1493 = vxor.u32 %v1479, 2147483648
    %v1494 = vmul.f32 %v1493, 1.442695
    %v1495 = vpow.pop %v1494
    %v1496 = vadd.f32 %v1495, 1.0
    %v1497 = vrcp.pop %v1496
    %v1498 = vmul.f32 1.0, %v1497
    %v1499 = vmul.f32 %v1491, %v1381
    %v1500 = vmul.f32 %v1485, %v1492
    %v1501 = vadd.f32 %v1499, %v1500
    %v1502 = vtanh.pop %v1501
    %v1503 = vmul.f32 %v1498, %v1502
    %v1504 = vtanh.pop %v1503
    %v1505 = vmax.f32 %v1385, %v1504
    %v1506 = vtanh.pop %v1505
    %v1507 = vpack.c.bf16 %v1506, %v1506
    %v1508 = vld [vmem:[#allocation8] sm:$0xf]
    %v1509 = vld [vmem:[#allocation8 + $0x4] sm:$0xf]
    %v1510 = vld [vmem:[#allocation8 + $0x8] sm:$0xf]
    %v1511 = vld [vmem:[#allocation8 + $0xc] sm:$0xf]
    %v1512 = vld [vmem:[#allocation8 + $0x10] sm:$0xf]
    %v1513 = vld [vmem:[#allocation8 + $0x14] sm:$0xf]
    %v1514 = vld [vmem:[#allocation8 + $0x18] sm:$0xf]
    %v1515 = vld [vmem:[#allocation8 + $0x1c] sm:$0xf]
    %v1516 = vld [vmem:[#allocation8 + $0x20] sm:$0xf]
    %v1517 = vld [vmem:[#allocation8 + $0x24] sm:$0xf]
    %v1518 = vld [vmem:[#allocation8 + $0x28] sm:$0xf]
    %v1519 = vld [vmem:[#allocation8 + $0x2c] sm:$0xf]
    %v1520 = vld [vmem:[#allocation8 + $0x30] sm:$0xf]
    %v1521 = vld [vmem:[#allocation8 + $0x34] sm:$0xf]
    %v1522 = vld [vmem:[#allocation8 + $0x38] sm:$0xf]
    %v1523 = vld [vmem:[#allocation8 + $0x3c] sm:$0xf]
    %v1524 = vld [vmem:[%s5] sm:$0x1]
    %v1526 = vlaneseq
    %v1527 = vshrl.u32 %v1526, 7
    %v1528 = vsub.s32 0, %v1527
    %v1529 = vrot.slane %v1524, %v1528
    %v1547 = vunpack.c.l.b16 %v1508
    %v1548 = vunpack.c.l.b16 %v1509
    %v1549 = vunpack.c.l.b16 %v1510
    %v1550 = vunpack.c.l.b16 %v1511
    %v1551 = vunpack.c.l.b16 %v1512
    %v1552 = vunpack.c.l.b16 %v1513
    %v1553 = vunpack.c.l.b16 %v1514
    %v1554 = vunpack.c.l.b16 %v1515
    %v1555 = vunpack.c.l.b16 %v1516
    %v1556 = vunpack.c.l.b16 %v1517
    %v1557 = vunpack.c.l.b16 %v1518
    %v1558 = vunpack.c.l.b16 %v1519
    %v1559 = vunpack.c.l.b16 %v1520
    %v1560 = vunpack.c.l.b16 %v1521
    %v1561 = vunpack.c.l.b16 %v1522
    %v1562 = vunpack.c.l.b16 %v1523
    %v1563 = vpack.c.b16 %v1548, %v1547
    %v1564 = vpack.c.b16 %v1550, %v1549
    %v1565 = vpack.c.b16 %v1552, %v1551
    %v1566 = vpack.c.b16 %v1554, %v1553
    %v1567 = vpack.c.b16 %v1556, %v1555
    %v1568 = vpack.c.b16 %v1558, %v1557
    %v1569 = vpack.c.b16 %v1560, %v1559
    %v1570 = vpack.c.b16 %v1562, %v1561
    %1579 = vmatprep.subr.bf16.mxu0 0
    %1580 = vmatpush1.bf16.msra.mxu0 %v1563
    %1581 = vmatprep.subr.bf16.mxu0 0
    %1582 = vmatpush1.bf16.msra.mxu0 %v1564
    %1583 = vmatprep.subr.bf16.mxu0 0
    %1584 = vmatpush1.bf16.msra.mxu0 %v1565
    %1585 = vmatprep.subr.bf16.mxu0 0
    %1586 = vmatpush1.bf16.msra.mxu0 %v1566
    %1587 = vmatprep.subr.bf16.mxu0 0
    %1588 = vmatpush1.bf16.msra.mxu0 %v1567
    %1589 = vmatprep.subr.bf16.mxu0 0
    %1590 = vmatpush1.bf16.msra.mxu0 %v1568
    %1591 = vmatprep.subr.bf16.mxu0 0
    %1592 = vmatpush1.bf16.msra.mxu0 %v1569
    %1593 = vmatprep.subr.bf16.mxu0 0
    %1594 = vmatpush1.bf16.msra.mxu0 %v1570
    %1595 = vmatprep.subr.bf16.mxu0 0
    %1596 = vmatpush1.bf16.msra.mxu0 0
    %1597 = vmatprep.subr.bf16.mxu0 0
    %1598 = vmatpush1.bf16.msra.mxu0 0
    %1599 = vmatprep.subr.bf16.mxu0 0
    %1600 = vmatpush1.bf16.msra.mxu0 0
    %1601 = vmatprep.subr.bf16.mxu0 0
    %1602 = vmatpush1.bf16.msra.mxu0 0
    %1603 = vmatprep.subr.bf16.mxu0 0
    %1604 = vmatpush1.bf16.msra.mxu0 0
    %1605 = vmatprep.subr.bf16.mxu0 0
    %1606 = vmatpush1.bf16.msra.mxu0 0
    %1607 = vmatprep.subr.bf16.mxu0 0
    %1608 = vmatpush1.bf16.msra.mxu0 0
    %1609 = vmatprep.subr.bf16.mxu0 0
    %1610 = vmatpush1.bf16.msra.mxu0 0
    %1611 = vmatprep.mubr.bf16.mxu0 0
    %1612 = vmatmul.mubr.bf16.gmra.mrb[0].mxu0 %v1507
    %v1613 = vpop.f32.mrb[0].mxu0
    %v1614 = vadd.f32 %v1529, %v1613
    %v1615 = vpop.f32.mrb[0].mxu0
    %v1616 = vpop.f32.mrb[0].mxu0
    %v1617 = vpop.f32.mrb[0].mxu0
    %1618 = vdwg.mxu0
    %1619 = vst [vmem:[#allocation9] sm:$0xff] %v1614
    // Predicated region
    $region38: #{tpu_custom_call.1} parent=1 // pred_check
      _
    $region39: #{tpu_custom_call.1} parent=1 // pred_check_branch
      %1621 = sbr.rel (0) target = $region41
    $region40: #{tpu_custom_call.1} parent=1 // pred_region
      %s1623 = ssub.s32 128, 128
      %1624 = vsyncadd [#allocation5], %s1623
      %s1626 = sshll.u32 [#allocation9], 4
      %s1627 = int_to_ptr.vmem [resolvable:$true] %s1626
      %1629 = dma.vmem_to_hbm [thread:$0]  %s1627, 128, %s6, [#allocation5]
    $region41: #{tpu_custom_call.1} parent=1 // pred_fallthru
      _
    // Predicated region
    $region42: #{tpu_custom_call.1} parent=1 // pred_check
      _
    $region43: #{tpu_custom_call.1} parent=1 // pred_check_branch
      %1631 = sbr.rel (0) target = $region45
    $region44: #{tpu_custom_call.1} parent=1 // pred_region
      %1632 = dma.done [#allocation5], 128
    $region45: #{tpu_custom_call.1} parent=1 // pred_fallthru
      _
    %1633 = vsyncpa [#allocation4], 1
    %1634 = vsyncpa [#allocation7], 1
    %1635 = vsyncpa [#allocation5], 1

</llo_original>
